<compile_context>
chip_gen: v5e
topology: v5e:2x2
jax: 0.10.0
libtpu: 0.0.40
codegen_flags: <defaults>
</compile_context>

<pallas_src>
import math
from functools import partial

import jax
import jax.numpy as jnp
from jax.experimental import pallas as pl
from jax.experimental.pallas import tpu as pltpu

DTYPE = jnp.float32          # stands in for clip_model.dtype (fp16 in real CLIP)
LN_EPS = 1e-5
NEG_BIG = -1e30              # finite large-negative causal mask (avoids inf-inf NaN)


# ----------------------------- helpers -------------------------------------

def _ln_f32(x, g, b):
    """LayerNorm in f32. x: (R, D); g, b: (1, D)."""
    mu = jnp.mean(x, axis=-1, keepdims=True)
    var = jnp.mean(jnp.square(x - mu), axis=-1, keepdims=True)
    return (x - mu) * jax.lax.rsqrt(var + LN_EPS) * g + b


def _pick_tb(B):
    """Batch tile: biggest divisor of B <= 4 that still leaves >=2 grid steps
    (so the 'parallel' B axis can shard across v7x's 2 TensorCores)."""
    for tb in (4, 3, 2):
        if B % tb == 0 and B // tb >= 2:
            return tb
    return 1


# ----------------------------- fused residual-block kernel ------------------

def _block_compute(x3, g1_ref, b1_ref, wqkv_ref, bqkv_ref, wo_ref, bo_ref,
                   g2_ref, b2_ref, wf_ref, bfc_ref, wp_ref, bp_ref, o_ref, n_heads):
    """Whole residual block on a (TB, L, D) tile, entirely in VMEM.

    x3: f32 (TB, L, D) residual stream (positional embedding already added).
    Weights are bf16, biases / LN params are f32 (1, N).
    """
    TB, L, D = x3.shape
    hd = D // n_heads
    x = x3.reshape(TB * L, D)                                   # (R, D) f32

    # ---- LN1 + QKV projection: one M=TB*L, K=D, N=3D matmul --------------
    h = _ln_f32(x, g1_ref[...].astype(jnp.float32), b1_ref[...].astype(jnp.float32))
    qkv = jnp.dot(h.astype(jnp.bfloat16), wqkv_ref[...],
                  preferred_element_type=jnp.float32) + bqkv_ref[...].astype(jnp.float32)

    # ---- causal multi-head attention (scale pre-folded into W_q) ----------
    row = jax.lax.broadcasted_iota(jnp.int32, (L, L), 0)
    col = jax.lax.broadcasted_iota(jnp.int32, (L, L), 1)
    neg = jnp.where(col > row, NEG_BIG, 0.0).astype(jnp.float32)
    dn = (((1,), (1,)), ((), ()))                               # q·kᵀ without transpose

    outs = []
    for t in range(TB):                                         # static, small
        qkv_t = qkv[t * L:(t + 1) * L, :]                       # (L, 3D) sublane slice
        heads = []
        for hh in range(n_heads):                               # static unrolled heads
            q = qkv_t[:, hh * hd:(hh + 1) * hd].astype(jnp.bfloat16)
            k = qkv_t[:, D + hh * hd:D + (hh + 1) * hd].astype(jnp.bfloat16)
            v = qkv_t[:, 2 * D + hh * hd:2 * D + (hh + 1) * hd].astype(jnp.bfloat16)
            s = jax.lax.dot_general(q, k, dn, preferred_element_type=jnp.float32) + neg
            s = s - jnp.max(s, axis=-1, keepdims=True)
            p = jnp.exp(s)
            p = p * pl.reciprocal(jnp.sum(p, axis=-1, keepdims=True), approx=True)
            heads.append(jnp.dot(p.astype(jnp.bfloat16), v,
                                 preferred_element_type=jnp.float32))
        outs.append(jnp.concatenate(heads, axis=-1))            # (L, D) merged heads
    o_attn = jnp.concatenate(outs, axis=0) if TB > 1 else outs[0]   # (R, D) f32

    # one K=D out-projection matmul + residual add (f32)
    x = x + jnp.dot(o_attn.astype(jnp.bfloat16), wo_ref[...],
                    preferred_element_type=jnp.float32) + bo_ref[...].astype(jnp.float32)

    # ---- LN2 + MLP (fc -> QuickGELU -> proj) + residual --------------------
    h2 = _ln_f32(x, g2_ref[...].astype(jnp.float32), b2_ref[...].astype(jnp.float32))
    u = jnp.dot(h2.astype(jnp.bfloat16), wf_ref[...],
                preferred_element_type=jnp.float32) + bfc_ref[...].astype(jnp.float32)
    u = u * jax.nn.sigmoid(1.702 * u)                           # QuickGELU in f32
    x = x + jnp.dot(u.astype(jnp.bfloat16), wp_ref[...],
                    preferred_element_type=jnp.float32) + bp_ref[...].astype(jnp.float32)

    o_ref[...] = x.reshape(TB, L, D).astype(o_ref.dtype)


def _block_kernel(x_ref, g1_ref, b1_ref, wqkv_ref, bqkv_ref, wo_ref, bo_ref,
                  g2_ref, b2_ref, wf_ref, bfc_ref, wp_ref, bp_ref, o_ref, *, n_heads):
    _block_compute(x_ref[...].astype(jnp.float32),
                   g1_ref, b1_ref, wqkv_ref, bqkv_ref, wo_ref, bo_ref,
                   g2_ref, b2_ref, wf_ref, bfc_ref, wp_ref, bp_ref, o_ref, n_heads)


def _block0_kernel(x_ref, pos_ref, g1_ref, b1_ref, wqkv_ref, bqkv_ref, wo_ref, bo_ref,
                   g2_ref, b2_ref, wf_ref, bfc_ref, wp_ref, bp_ref, o_ref, *, n_heads):
    # First block also adds the positional embedding (fused, one fewer HBM pass).
    x = x_ref[...].astype(jnp.float32) + pos_ref[...][None].astype(jnp.float32)
    _block_compute(x, g1_ref, b1_ref, wqkv_ref, bqkv_ref, wo_ref, bo_ref,
                   g2_ref, b2_ref, wf_ref, bfc_ref, wp_ref, bp_ref, o_ref, n_heads)


def _eot_ln_proj_kernel(x_ref, g_ref, b_ref, w_ref, o_ref):
    # Fused final LayerNorm + text projection on the gathered EOT rows: (B, D) -> (B, E)
    x = x_ref[...].astype(jnp.float32)
    h = _ln_f32(x, g_ref[...].astype(jnp.float32), b_ref[...].astype(jnp.float32))
    o_ref[...] = jnp.dot(h.astype(jnp.bfloat16), w_ref[...],
                         preferred_element_type=jnp.float32).astype(o_ref.dtype)


# ----------------------------- pallas_call wrappers -------------------------

_CP = pltpu.CompilerParams(dimension_semantics=("parallel",),
                           vmem_limit_bytes=32 * 1024 * 1024)


def _prep_block(p, n_heads):
    """Fold 1/sqrt(head_dim) into the Q third of the QKV projection, cast matmul
    weights to bf16, reshape biases / LN params to (1, N)."""
    D = p['ln1_g'].shape[0]
    scale = 1.0 / math.sqrt(D // n_heads)
    w_in = jnp.concatenate([p['attn_in_w'][:, :D] * scale, p['attn_in_w'][:, D:]], axis=1)
    b_in = jnp.concatenate([p['attn_in_b'][:D] * scale, p['attn_in_b'][D:]], axis=0)
    return (
        p['ln1_g'].reshape(1, -1), p['ln1_b'].reshape(1, -1),
        w_in.astype(jnp.bfloat16), b_in.reshape(1, -1),
        p['attn_out_w'].astype(jnp.bfloat16), p['attn_out_b'].reshape(1, -1),
        p['ln2_g'].reshape(1, -1), p['ln2_b'].reshape(1, -1),
        p['mlp_fc_w'].astype(jnp.bfloat16), p['mlp_fc_b'].reshape(1, -1),
        p['mlp_proj_w'].astype(jnp.bfloat16), p['mlp_proj_b'].reshape(1, -1),
    )


def _fused_block(x, blk_args, pos, n_heads, tb):
    B, L, D = x.shape
    grid = (B // tb,)
    x_spec = pl.BlockSpec((tb, L, D), lambda i: (i, 0, 0))
    full = lambda a: pl.BlockSpec(a.shape, lambda i: (0,) * a.ndim)
    if pos is None:
        kern = partial(_block_kernel, n_heads=n_heads)
        in_specs = [x_spec] + [full(a) for a in blk_args]
        ins = (x, *blk_args)
    else:
        kern = partial(_block0_kernel, n_heads=n_heads)
        in_specs = [x_spec, full(pos)] + [full(a) for a in blk_args]
        ins = (x, pos, *blk_args)
    return pl.pallas_call(
        kern,
        grid=grid,
        in_specs=in_specs,
        out_specs=x_spec,
        out_shape=jax.ShapeDtypeStruct((B, L, D), x.dtype),
        compiler_params=_CP,
    )(*ins)


def _fused_eot_ln_proj(x_eot, g, b, w):
    B, D = x_eot.shape
    E = w.shape[1]
    vmem = pl.BlockSpec(memory_space=pltpu.MemorySpace.VMEM)
    return pl.pallas_call(
        _eot_ln_proj_kernel,
        in_specs=[vmem] * 4,
        out_specs=vmem,
        out_shape=jax.ShapeDtypeStruct((B, E), x_eot.dtype),
    )(x_eot, g.reshape(1, -1), b.reshape(1, -1), w.astype(jnp.bfloat16))


# ----------------------------- transformer ---------------------------------

def text_encoder_forward(params, prompts, tokenized_prompts):
    # prompts: (B, L, D) float; tokenized_prompts: (B, L) int32
    x = prompts.astype(DTYPE)
    B, L, D = x.shape
    H = params['n_heads']
    tb = _pick_tb(B)
    pos = params['pos_emb'].astype(DTYPE)
    for i, p in enumerate(params['blocks']):
        blk_args = _prep_block(p, H)
        x = _fused_block(x, blk_args, pos if i == 0 else None, H, tb)
    # EOT gather BEFORE the final LN (LN is row-wise, identical result); the final LN
    # and the text projection are fused into one tiny (B, D) kernel.
    eot = jnp.argmax(tokenized_prompts, axis=-1)     # EOT = highest token id
    # TODO(synk): dynamic per-row EOT gather stays in JAX glue (no clean static BlockSpec).
    x_eot = x[jnp.arange(B), eot]                    # (B, D)
    return _fused_eot_ln_proj(x_eot, params['lnf_g'], params['lnf_b'],
                              params['text_projection'])            # (B, E)


# ----------------------------- parameters -----------------------------------

def init_params(key, *, n_layers, width, n_heads, context_length, embed_dim):
    keys = jax.random.split(key, 2 + n_layers)
    params = {
        'n_heads': n_heads,
        'pos_emb': 0.01 * jax.random.normal(keys[0], (context_length, width), DTYPE),
        'lnf_g': jnp.ones((width,), DTYPE),
        'lnf_b': jnp.zeros((width,), DTYPE),
        'text_projection': (width ** -0.5)
            * jax.random.normal(keys[1], (width, embed_dim), DTYPE),
    }
    blocks = []
    s = 0.02
    for i in range(n_layers):
        bk = jax.random.split(keys[2 + i], 8)
        blocks.append({
            'ln1_g': jnp.ones((width,), DTYPE),
            'ln1_b': jnp.zeros((width,), DTYPE),
            'attn_in_w': s * jax.random.normal(bk[0], (width, 3 * width), DTYPE),
            'attn_in_b': s * jax.random.normal(bk[1], (3 * width,), DTYPE),
            'attn_out_w': s * jax.random.normal(bk[2], (width, width), DTYPE),
            'attn_out_b': s * jax.random.normal(bk[3], (width,), DTYPE),
            'ln2_g': jnp.ones((width,), DTYPE),
            'ln2_b': jnp.zeros((width,), DTYPE),
            'mlp_fc_w': s * jax.random.normal(bk[4], (width, 4 * width), DTYPE),
            'mlp_fc_b': s * jax.random.normal(bk[5], (4 * width,), DTYPE),
            'mlp_proj_w': s * jax.random.normal(bk[6], (4 * width, width), DTYPE),
            'mlp_proj_b': s * jax.random.normal(bk[7], (width,), DTYPE),
        })
    params['blocks'] = blocks
    return params


# ----------------------------- pure-JAX reference ---------------------------
# Mirrors the PyTorch TextEncoder math; matmuls fed bf16 with f32 accumulation to
# match the kernel's MXU precision (real CLIP runs fp16 anyway).

def reference_forward(params, prompts, tokenized_prompts):
    bf = jnp.bfloat16

    def ln(x, g, b):
        x = x.astype(jnp.float32)
        mu = x.mean(-1, keepdims=True)
        var = ((x - mu) ** 2).mean(-1, keepdims=True)
        return (x - mu) * jax.lax.rsqrt(var + LN_EPS) * g + b

    def mm(a, w):
        return jnp.dot(a.astype(bf), w.astype(bf), preferred_element_type=jnp.float32)

    x = prompts.astype(jnp.float32) + params['pos_emb']
    H = params['n_heads']
    B, L, D = x.shape
    hd = D // H
    scale = 1.0 / math.sqrt(hd)
    causal_neg = jnp.where(jnp.triu(jnp.ones((L, L), jnp.bool_), k=1), NEG_BIG, 0.0)

    for p in params['blocks']:
        h = ln(x, p['ln1_g'], p['ln1_b'])
        qkv = mm(h, p['attn_in_w']) + p['attn_in_b']
        q, k, v = jnp.split(qkv, 3, axis=-1)
        heads = lambda t: t.reshape(B, L, H, hd).transpose(0, 2, 1, 3)
        q, k, v = heads(q * scale), heads(k), heads(v)
        s = jnp.einsum('bhqd,bhkd->bhqk', q.astype(bf), k.astype(bf),
                       preferred_element_type=jnp.float32) + causal_neg
        s = s - s.max(-1, keepdims=True)
        pr = jnp.exp(s)
        pr = pr / pr.sum(-1, keepdims=True)
        o = jnp.einsum('bhqk,bhkd->bhqd', pr.astype(bf), v.astype(bf),
                       preferred_element_type=jnp.float32)
        o = o.transpose(0, 2, 1, 3).reshape(B, L, D)
        x = x + mm(o, p['attn_out_w']) + p['attn_out_b']
        h = ln(x, p['ln2_g'], p['ln2_b'])
        u = mm(h, p['mlp_fc_w']) + p['mlp_fc_b']
        u = u * jax.nn.sigmoid(1.702 * u)
        x = x + mm(u, p['mlp_proj_w']) + p['mlp_proj_b']

    x = ln(x, params['lnf_g'], params['lnf_b'])
    eot = jnp.argmax(tokenized_prompts, axis=-1)
    x_eot = x[jnp.arange(B), eot]
    return mm(x_eot, params['text_projection'])


# ----------------------------- main ------------------------------------------

if __name__ == "__main__":
    B, L, D, H, LAYERS, E = 2, 8, 32, 4, 2, 16   # batch, seq, width, heads, layers, proj dim
    key = jax.random.PRNGKey(0)
    kp, kx, kt = jax.random.split(key, 3)

    params = init_params(kp, n_layers=LAYERS, width=D, n_heads=H,
                         context_length=L, embed_dim=E)

    prompts = 0.1 * jax.random.normal(kx, (B, L, D), DTYPE)          # learned prompt embeddings
    tok = jax.random.randint(kt, (B, L), 1, 1000).astype(jnp.int32)  # synthetic token ids
    tok = tok.at[0, 5].set(49407).at[1, 3].set(49407)                # EOT token (= argmax pos)

    out = text_encoder_forward(params, prompts, tok)
    out = jax.block_until_ready(out)

    ref = reference_forward(params, prompts, tok)
    assert out.shape == (B, E), out.shape
    assert jnp.allclose(out, ref, atol=1e-2, rtol=1e-2), \
        float(jnp.max(jnp.abs(out - ref)))

    print("KERNEL_OK")
</pallas_src>

<mosaic_0001>
module attributes {stable_mosaic.version = 11 : i64} {
  func.func @_block0_kernel(%arg0: i32, %arg1: memref<1x8x32xf32, #tpu.memory_space<vmem>>, %arg2: memref<8x32xf32, #tpu.memory_space<vmem>>, %arg3: memref<1x32xf32, #tpu.memory_space<vmem>>, %arg4: memref<1x32xf32, #tpu.memory_space<vmem>>, %arg5: memref<32x96xbf16, #tpu.memory_space<vmem>>, %arg6: memref<1x96xf32, #tpu.memory_space<vmem>>, %arg7: memref<32x32xbf16, #tpu.memory_space<vmem>>, %arg8: memref<1x32xf32, #tpu.memory_space<vmem>>, %arg9: memref<1x32xf32, #tpu.memory_space<vmem>>, %arg10: memref<1x32xf32, #tpu.memory_space<vmem>>, %arg11: memref<32x128xbf16, #tpu.memory_space<vmem>>, %arg12: memref<1x128xf32, #tpu.memory_space<vmem>>, %arg13: memref<128x32xbf16, #tpu.memory_space<vmem>>, %arg14: memref<1x32xf32, #tpu.memory_space<vmem>>, %arg15: memref<1x8x32xf32, #tpu.memory_space<vmem>>) attributes {dimension_semantics = [#tpu.dimension_semantics<parallel>], iteration_bounds = array<i64: 2>, scalar_prefetch = 0 : i64, scratch_operands = 0 : i64, tpu.core_type = #tpu.core_type<tc>, window_params = [{transform_indices = @transform_0, window_bounds = array<i64: 1, 8, 32>}, {pipeline_mode = #tpu.pipeline_mode<synchronous>, transform_indices = @transform_1, window_bounds = array<i64: 8, 32>}, {pipeline_mode = #tpu.pipeline_mode<synchronous>, transform_indices = @transform_2, window_bounds = array<i64: 1, 32>}, {pipeline_mode = #tpu.pipeline_mode<synchronous>, transform_indices = @transform_3, window_bounds = array<i64: 1, 32>}, {pipeline_mode = #tpu.pipeline_mode<synchronous>, transform_indices = @transform_4, window_bounds = array<i64: 32, 96>}, {pipeline_mode = #tpu.pipeline_mode<synchronous>, transform_indices = @transform_5, window_bounds = array<i64: 1, 96>}, {pipeline_mode = #tpu.pipeline_mode<synchronous>, transform_indices = @transform_6, window_bounds = array<i64: 32, 32>}, {pipeline_mode = #tpu.pipeline_mode<synchronous>, transform_indices = @transform_7, window_bounds = array<i64: 1, 32>}, {pipeline_mode = #tpu.pipeline_mode<synchronous>, transform_indices = @transform_8, window_bounds = array<i64: 1, 32>}, {pipeline_mode = #tpu.pipeline_mode<synchronous>, transform_indices = @transform_9, window_bounds = array<i64: 1, 32>}, {pipeline_mode = #tpu.pipeline_mode<synchronous>, transform_indices = @transform_10, window_bounds = array<i64: 32, 128>}, {pipeline_mode = #tpu.pipeline_mode<synchronous>, transform_indices = @transform_11, window_bounds = array<i64: 1, 128>}, {pipeline_mode = #tpu.pipeline_mode<synchronous>, transform_indices = @transform_12, window_bounds = array<i64: 128, 32>}, {pipeline_mode = #tpu.pipeline_mode<synchronous>, transform_indices = @transform_13, window_bounds = array<i64: 1, 32>}, {transform_indices = @transform_14, window_bounds = array<i64: 1, 8, 32>}]} {
    %c0 = arith.constant 0 : index
    %c0_0 = arith.constant 0 : index
    %c0_1 = arith.constant 0 : index
    %0 = vector.load %arg1[%c0, %c0_0, %c0_1] : memref<1x8x32xf32, #tpu.memory_space<vmem>>, vector<1x8x32xf32>
    %c0_2 = arith.constant 0 : index
    %c0_3 = arith.constant 0 : index
    %1 = vector.load %arg2[%c0_2, %c0_3] : memref<8x32xf32, #tpu.memory_space<vmem>>, vector<8x32xf32>
    %2 = vector.shape_cast %1 : vector<8x32xf32> to vector<1x8x32xf32>
    %3 = arith.addf %0, %2 : vector<1x8x32xf32>
    %4 = vector.shape_cast %3 : vector<1x8x32xf32> to vector<8x32xf32>
    %c0_4 = arith.constant 0 : index
    %c0_5 = arith.constant 0 : index
    %5 = vector.load %arg3[%c0_4, %c0_5] : memref<1x32xf32, #tpu.memory_space<vmem>>, vector<1x32xf32>
    %c0_6 = arith.constant 0 : index
    %c0_7 = arith.constant 0 : index
    %6 = vector.load %arg4[%c0_6, %c0_7] : memref<1x32xf32, #tpu.memory_space<vmem>>, vector<1x32xf32>
    %cst = arith.constant dense<0.000000e+00> : vector<8xf32>
    %7 = vector.multi_reduction <add>, %4, %cst [1] : vector<8x32xf32> to vector<8xf32>
    %8 = vector.shape_cast %7 : vector<8xf32> to vector<8x1xf32>
    %cst_8 = arith.constant 3.200000e+01 : f32
    %9 = vector.broadcast %cst_8 : f32 to vector<8x1xf32>
    %10 = arith.divf %8, %9 : vector<8x1xf32>
    %11 = vector.broadcast %10 : vector<8x1xf32> to vector<8x32xf32>
    %12 = arith.subf %4, %11 : vector<8x32xf32>
    %13 = arith.mulf %12, %12 : vector<8x32xf32>
    %cst_9 = arith.constant dense<0.000000e+00> : vector<8xf32>
    %14 = vector.multi_reduction <add>, %13, %cst_9 [1] : vector<8x32xf32> to vector<8xf32>
    %15 = vector.shape_cast %14 : vector<8xf32> to vector<8x1xf32>
    %cst_10 = arith.constant 3.200000e+01 : f32
    %16 = vector.broadcast %cst_10 : f32 to vector<8x1xf32>
    %17 = arith.divf %15, %16 : vector<8x1xf32>
    %18 = vector.broadcast %10 : vector<8x1xf32> to vector<8x32xf32>
    %19 = arith.subf %4, %18 : vector<8x32xf32>
    %cst_11 = arith.constant 9.99999974E-6 : f32
    %20 = vector.broadcast %cst_11 : f32 to vector<8x1xf32>
    %21 = arith.addf %17, %20 : vector<8x1xf32>
    %22 = math.rsqrt %21 : vector<8x1xf32>
    %23 = vector.broadcast %22 : vector<8x1xf32> to vector<8x32xf32>
    %24 = arith.mulf %19, %23 : vector<8x32xf32>
    %25 = vector.broadcast %5 : vector<1x32xf32> to vector<8x32xf32>
    %26 = arith.mulf %24, %25 : vector<8x32xf32>
    %27 = vector.broadcast %6 : vector<1x32xf32> to vector<8x32xf32>
    %28 = arith.addf %26, %27 : vector<8x32xf32>
    %29 = arith.truncf %28 : vector<8x32xf32> to vector<8x32xbf16>
    %c0_12 = arith.constant 0 : index
    %c0_13 = arith.constant 0 : index
    %30 = vector.load %arg5[%c0_12, %c0_13] : memref<32x96xbf16, #tpu.memory_space<vmem>>, vector<32x96xbf16>
    %cst_14 = arith.constant dense<0.000000e+00> : vector<8x96xf32>
    %31 = tpu.matmul %29, %30, %cst_14 {dimension_numbers = #tpu.dot_dimension_numbers<[1], [0], [0], [1], [0, 0, 1, 1], [], []>} : vector<8x32xbf16>, vector<32x96xbf16>, vector<8x96xf32> -> vector<8x96xf32>
    %c0_15 = arith.constant 0 : index
    %c0_16 = arith.constant 0 : index
    %32 = vector.load %arg6[%c0_15, %c0_16] : memref<1x96xf32, #tpu.memory_space<vmem>>, vector<1x96xf32>
    %33 = vector.broadcast %32 : vector<1x96xf32> to vector<8x96xf32>
    %34 = arith.addf %31, %33 : vector<8x96xf32>
    %35 = tpu.iota {dimensions = array<i32: 0>} : vector<8x8xi32>
    %36 = tpu.iota {dimensions = array<i32: 1>} : vector<8x8xi32>
    %37 = arith.cmpi sgt, %36, %35 : vector<8x8xi32>
    %cst_17 = arith.constant -1.000000e+30 : f32
    %cst_18 = arith.constant 0.000000e+00 : f32
    %38 = vector.broadcast %cst_17 : f32 to vector<8x8xf32>
    %39 = vector.broadcast %cst_18 : f32 to vector<8x8xf32>
    %40 = arith.select %37, %38, %39 : vector<8x8xi1>, vector<8x8xf32>
    %41 = vector.extract_strided_slice %34 {offsets = [0, 0], sizes = [8, 8], strides = [1, 1]} : vector<8x96xf32> to vector<8x8xf32>
    %42 = arith.truncf %41 : vector<8x8xf32> to vector<8x8xbf16>
    %43 = vector.extract_strided_slice %34 {offsets = [0, 32], sizes = [8, 8], strides = [1, 1]} : vector<8x96xf32> to vector<8x8xf32>
    %44 = arith.truncf %43 : vector<8x8xf32> to vector<8x8xbf16>
    %45 = vector.extract_strided_slice %34 {offsets = [0, 64], sizes = [8, 8], strides = [1, 1]} : vector<8x96xf32> to vector<8x8xf32>
    %46 = arith.truncf %45 : vector<8x8xf32> to vector<8x8xbf16>
    %cst_19 = arith.constant dense<0.000000e+00> : vector<8x8xf32>
    %47 = tpu.matmul %42, %44, %cst_19 {dimension_numbers = #tpu.dot_dimension_numbers<[1], [1], [0], [0], [0, 0, 1, 0], [], []>} : vector<8x8xbf16>, vector<8x8xbf16>, vector<8x8xf32> -> vector<8x8xf32>
    %48 = arith.addf %47, %40 : vector<8x8xf32>
    %cst_20 = arith.constant dense<0xFF800000> : vector<8xf32>
    %49 = vector.multi_reduction <maximumf>, %48, %cst_20 [1] : vector<8x8xf32> to vector<8xf32>
    %50 = vector.shape_cast %49 : vector<8xf32> to vector<8x1xf32>
    %51 = vector.broadcast %50 : vector<8x1xf32> to vector<8x8xf32>
    %52 = arith.subf %48, %51 : vector<8x8xf32>
    %53 = math.exp %52 : vector<8x8xf32>
    %cst_21 = arith.constant dense<0.000000e+00> : vector<8xf32>
    %54 = vector.multi_reduction <add>, %53, %cst_21 [1] : vector<8x8xf32> to vector<8xf32>
    %55 = vector.shape_cast %54 : vector<8xf32> to vector<8x1xf32>
    %56 = tpu.reciprocal %55 {approx = true} : vector<8x1xf32> -> vector<8x1xf32>
    %57 = vector.broadcast %56 : vector<8x1xf32> to vector<8x8xf32>
    %58 = arith.mulf %53, %57 : vector<8x8xf32>
    %59 = arith.truncf %58 : vector<8x8xf32> to vector<8x8xbf16>
    %cst_22 = arith.constant dense<0.000000e+00> : vector<8x8xf32>
    %60 = tpu.matmul %59, %46, %cst_22 {dimension_numbers = #tpu.dot_dimension_numbers<[1], [0], [0], [1], [0, 0, 1, 1], [], []>} : vector<8x8xbf16>, vector<8x8xbf16>, vector<8x8xf32> -> vector<8x8xf32>
    %61 = vector.extract_strided_slice %34 {offsets = [0, 8], sizes = [8, 8], strides = [1, 1]} : vector<8x96xf32> to vector<8x8xf32>
    %62 = arith.truncf %61 : vector<8x8xf32> to vector<8x8xbf16>
    %63 = vector.extract_strided_slice %34 {offsets = [0, 40], sizes = [8, 8], strides = [1, 1]} : vector<8x96xf32> to vector<8x8xf32>
    %64 = arith.truncf %63 : vector<8x8xf32> to vector<8x8xbf16>
    %65 = vector.extract_strided_slice %34 {offsets = [0, 72], sizes = [8, 8], strides = [1, 1]} : vector<8x96xf32> to vector<8x8xf32>
    %66 = arith.truncf %65 : vector<8x8xf32> to vector<8x8xbf16>
    %cst_23 = arith.constant dense<0.000000e+00> : vector<8x8xf32>
    %67 = tpu.matmul %62, %64, %cst_23 {dimension_numbers = #tpu.dot_dimension_numbers<[1], [1], [0], [0], [0, 0, 1, 0], [], []>} : vector<8x8xbf16>, vector<8x8xbf16>, vector<8x8xf32> -> vector<8x8xf32>
    %68 = arith.addf %67, %40 : vector<8x8xf32>
    %cst_24 = arith.constant dense<0xFF800000> : vector<8xf32>
    %69 = vector.multi_reduction <maximumf>, %68, %cst_24 [1] : vector<8x8xf32> to vector<8xf32>
    %70 = vector.shape_cast %69 : vector<8xf32> to vector<8x1xf32>
    %71 = vector.broadcast %70 : vector<8x1xf32> to vector<8x8xf32>
    %72 = arith.subf %68, %71 : vector<8x8xf32>
    %73 = math.exp %72 : vector<8x8xf32>
    %cst_25 = arith.constant dense<0.000000e+00> : vector<8xf32>
    %74 = vector.multi_reduction <add>, %73, %cst_25 [1] : vector<8x8xf32> to vector<8xf32>
    %75 = vector.shape_cast %74 : vector<8xf32> to vector<8x1xf32>
    %76 = tpu.reciprocal %75 {approx = true} : vector<8x1xf32> -> vector<8x1xf32>
    %77 = vector.broadcast %76 : vector<8x1xf32> to vector<8x8xf32>
    %78 = arith.mulf %73, %77 : vector<8x8xf32>
    %79 = arith.truncf %78 : vector<8x8xf32> to vector<8x8xbf16>
    %cst_26 = arith.constant dense<0.000000e+00> : vector<8x8xf32>
    %80 = tpu.matmul %79, %66, %cst_26 {dimension_numbers = #tpu.dot_dimension_numbers<[1], [0], [0], [1], [0, 0, 1, 1], [], []>} : vector<8x8xbf16>, vector<8x8xbf16>, vector<8x8xf32> -> vector<8x8xf32>
    %81 = vector.extract_strided_slice %34 {offsets = [0, 16], sizes = [8, 8], strides = [1, 1]} : vector<8x96xf32> to vector<8x8xf32>
    %82 = arith.truncf %81 : vector<8x8xf32> to vector<8x8xbf16>
    %83 = vector.extract_strided_slice %34 {offsets = [0, 48], sizes = [8, 8], strides = [1, 1]} : vector<8x96xf32> to vector<8x8xf32>
    %84 = arith.truncf %83 : vector<8x8xf32> to vector<8x8xbf16>
    %85 = vector.extract_strided_slice %34 {offsets = [0, 80], sizes = [8, 8], strides = [1, 1]} : vector<8x96xf32> to vector<8x8xf32>
    %86 = arith.truncf %85 : vector<8x8xf32> to vector<8x8xbf16>
    %cst_27 = arith.constant dense<0.000000e+00> : vector<8x8xf32>
    %87 = tpu.matmul %82, %84, %cst_27 {dimension_numbers = #tpu.dot_dimension_numbers<[1], [1], [0], [0], [0, 0, 1, 0], [], []>} : vector<8x8xbf16>, vector<8x8xbf16>, vector<8x8xf32> -> vector<8x8xf32>
    %88 = arith.addf %87, %40 : vector<8x8xf32>
    %cst_28 = arith.constant dense<0xFF800000> : vector<8xf32>
    %89 = vector.multi_reduction <maximumf>, %88, %cst_28 [1] : vector<8x8xf32> to vector<8xf32>
    %90 = vector.shape_cast %89 : vector<8xf32> to vector<8x1xf32>
    %91 = vector.broadcast %90 : vector<8x1xf32> to vector<8x8xf32>
    %92 = arith.subf %88, %91 : vector<8x8xf32>
    %93 = math.exp %92 : vector<8x8xf32>
    %cst_29 = arith.constant dense<0.000000e+00> : vector<8xf32>
    %94 = vector.multi_reduction <add>, %93, %cst_29 [1] : vector<8x8xf32> to vector<8xf32>
    %95 = vector.shape_cast %94 : vector<8xf32> to vector<8x1xf32>
    %96 = tpu.reciprocal %95 {approx = true} : vector<8x1xf32> -> vector<8x1xf32>
    %97 = vector.broadcast %96 : vector<8x1xf32> to vector<8x8xf32>
    %98 = arith.mulf %93, %97 : vector<8x8xf32>
    %99 = arith.truncf %98 : vector<8x8xf32> to vector<8x8xbf16>
    %cst_30 = arith.constant dense<0.000000e+00> : vector<8x8xf32>
    %100 = tpu.matmul %99, %86, %cst_30 {dimension_numbers = #tpu.dot_dimension_numbers<[1], [0], [0], [1], [0, 0, 1, 1], [], []>} : vector<8x8xbf16>, vector<8x8xbf16>, vector<8x8xf32> -> vector<8x8xf32>
    %101 = vector.extract_strided_slice %34 {offsets = [0, 24], sizes = [8, 8], strides = [1, 1]} : vector<8x96xf32> to vector<8x8xf32>
    %102 = arith.truncf %101 : vector<8x8xf32> to vector<8x8xbf16>
    %103 = vector.extract_strided_slice %34 {offsets = [0, 56], sizes = [8, 8], strides = [1, 1]} : vector<8x96xf32> to vector<8x8xf32>
    %104 = arith.truncf %103 : vector<8x8xf32> to vector<8x8xbf16>
    %105 = vector.extract_strided_slice %34 {offsets = [0, 88], sizes = [8, 8], strides = [1, 1]} : vector<8x96xf32> to vector<8x8xf32>
    %106 = arith.truncf %105 : vector<8x8xf32> to vector<8x8xbf16>
    %cst_31 = arith.constant dense<0.000000e+00> : vector<8x8xf32>
    %107 = tpu.matmul %102, %104, %cst_31 {dimension_numbers = #tpu.dot_dimension_numbers<[1], [1], [0], [0], [0, 0, 1, 0], [], []>} : vector<8x8xbf16>, vector<8x8xbf16>, vector<8x8xf32> -> vector<8x8xf32>
    %108 = arith.addf %107, %40 : vector<8x8xf32>
    %cst_32 = arith.constant dense<0xFF800000> : vector<8xf32>
    %109 = vector.multi_reduction <maximumf>, %108, %cst_32 [1] : vector<8x8xf32> to vector<8xf32>
    %110 = vector.shape_cast %109 : vector<8xf32> to vector<8x1xf32>
    %111 = vector.broadcast %110 : vector<8x1xf32> to vector<8x8xf32>
    %112 = arith.subf %108, %111 : vector<8x8xf32>
    %113 = math.exp %112 : vector<8x8xf32>
    %cst_33 = arith.constant dense<0.000000e+00> : vector<8xf32>
    %114 = vector.multi_reduction <add>, %113, %cst_33 [1] : vector<8x8xf32> to vector<8xf32>
    %115 = vector.shape_cast %114 : vector<8xf32> to vector<8x1xf32>
    %116 = tpu.reciprocal %115 {approx = true} : vector<8x1xf32> -> vector<8x1xf32>
    %117 = vector.broadcast %116 : vector<8x1xf32> to vector<8x8xf32>
    %118 = arith.mulf %113, %117 : vector<8x8xf32>
    %119 = arith.truncf %118 : vector<8x8xf32> to vector<8x8xbf16>
    %cst_34 = arith.constant dense<0.000000e+00> : vector<8x8xf32>
    %120 = tpu.matmul %119, %106, %cst_34 {dimension_numbers = #tpu.dot_dimension_numbers<[1], [0], [0], [1], [0, 0, 1, 1], [], []>} : vector<8x8xbf16>, vector<8x8xbf16>, vector<8x8xf32> -> vector<8x8xf32>
    %121 = tpu.concatenate %60, %80, %100, %120 in 1 : vector<8x8xf32>, vector<8x8xf32>, vector<8x8xf32>, vector<8x8xf32> -> vector<8x32xf32>
    %122 = arith.truncf %121 : vector<8x32xf32> to vector<8x32xbf16>
    %c0_35 = arith.constant 0 : index
    %c0_36 = arith.constant 0 : index
    %123 = vector.load %arg7[%c0_35, %c0_36] : memref<32x32xbf16, #tpu.memory_space<vmem>>, vector<32x32xbf16>
    %cst_37 = arith.constant dense<0.000000e+00> : vector<8x32xf32>
    %124 = tpu.matmul %122, %123, %cst_37 {dimension_numbers = #tpu.dot_dimension_numbers<[1], [0], [0], [1], [0, 0, 1, 1], [], []>} : vector<8x32xbf16>, vector<32x32xbf16>, vector<8x32xf32> -> vector<8x32xf32>
    %125 = arith.addf %4, %124 : vector<8x32xf32>
    %c0_38 = arith.constant 0 : index
    %c0_39 = arith.constant 0 : index
    %126 = vector.load %arg8[%c0_38, %c0_39] : memref<1x32xf32, #tpu.memory_space<vmem>>, vector<1x32xf32>
    %127 = vector.broadcast %126 : vector<1x32xf32> to vector<8x32xf32>
    %128 = arith.addf %125, %127 : vector<8x32xf32>
    %c0_40 = arith.constant 0 : index
    %c0_41 = arith.constant 0 : index
    %129 = vector.load %arg9[%c0_40, %c0_41] : memref<1x32xf32, #tpu.memory_space<vmem>>, vector<1x32xf32>
    %c0_42 = arith.constant 0 : index
    %c0_43 = arith.constant 0 : index
    %130 = vector.load %arg10[%c0_42, %c0_43] : memref<1x32xf32, #tpu.memory_space<vmem>>, vector<1x32xf32>
    %cst_44 = arith.constant dense<0.000000e+00> : vector<8xf32>
    %131 = vector.multi_reduction <add>, %128, %cst_44 [1] : vector<8x32xf32> to vector<8xf32>
    %132 = vector.shape_cast %131 : vector<8xf32> to vector<8x1xf32>
    %cst_45 = arith.constant 3.200000e+01 : f32
    %133 = vector.broadcast %cst_45 : f32 to vector<8x1xf32>
    %134 = arith.divf %132, %133 : vector<8x1xf32>
    %135 = vector.broadcast %134 : vector<8x1xf32> to vector<8x32xf32>
    %136 = arith.subf %128, %135 : vector<8x32xf32>
    %137 = arith.mulf %136, %136 : vector<8x32xf32>
    %cst_46 = arith.constant dense<0.000000e+00> : vector<8xf32>
    %138 = vector.multi_reduction <add>, %137, %cst_46 [1] : vector<8x32xf32> to vector<8xf32>
    %139 = vector.shape_cast %138 : vector<8xf32> to vector<8x1xf32>
    %cst_47 = arith.constant 3.200000e+01 : f32
    %140 = vector.broadcast %cst_47 : f32 to vector<8x1xf32>
    %141 = arith.divf %139, %140 : vector<8x1xf32>
    %142 = vector.broadcast %134 : vector<8x1xf32> to vector<8x32xf32>
    %143 = arith.subf %128, %142 : vector<8x32xf32>
    %cst_48 = arith.constant 9.99999974E-6 : f32
    %144 = vector.broadcast %cst_48 : f32 to vector<8x1xf32>
    %145 = arith.addf %141, %144 : vector<8x1xf32>
    %146 = math.rsqrt %145 : vector<8x1xf32>
    %147 = vector.broadcast %146 : vector<8x1xf32> to vector<8x32xf32>
    %148 = arith.mulf %143, %147 : vector<8x32xf32>
    %149 = vector.broadcast %129 : vector<1x32xf32> to vector<8x32xf32>
    %150 = arith.mulf %148, %149 : vector<8x32xf32>
    %151 = vector.broadcast %130 : vector<1x32xf32> to vector<8x32xf32>
    %152 = arith.addf %150, %151 : vector<8x32xf32>
    %153 = arith.truncf %152 : vector<8x32xf32> to vector<8x32xbf16>
    %c0_49 = arith.constant 0 : index
    %c0_50 = arith.constant 0 : index
    %154 = vector.load %arg11[%c0_49, %c0_50] : memref<32x128xbf16, #tpu.memory_space<vmem>>, vector<32x128xbf16>
    %cst_51 = arith.constant dense<0.000000e+00> : vector<8x128xf32>
    %155 = tpu.matmul %153, %154, %cst_51 {dimension_numbers = #tpu.dot_dimension_numbers<[1], [0], [0], [1], [0, 0, 1, 1], [], []>} : vector<8x32xbf16>, vector<32x128xbf16>, vector<8x128xf32> -> vector<8x128xf32>
    %c0_52 = arith.constant 0 : index
    %c0_53 = arith.constant 0 : index
    %156 = vector.load %arg12[%c0_52, %c0_53] : memref<1x128xf32, #tpu.memory_space<vmem>>, vector<1x128xf32>
    %157 = vector.broadcast %156 : vector<1x128xf32> to vector<8x128xf32>
    %158 = arith.addf %155, %157 : vector<8x128xf32>
    %cst_54 = arith.constant 1.702000e+00 : f32
    %159 = vector.broadcast %cst_54 : f32 to vector<8x128xf32>
    %160 = arith.mulf %159, %158 : vector<8x128xf32>
    %161 = arith.negf %160 : vector<8x128xf32>
    %162 = math.exp %161 : vector<8x128xf32>
    %cst_55 = arith.constant 1.000000e+00 : f32
    %163 = vector.broadcast %cst_55 : f32 to vector<8x128xf32>
    %164 = arith.addf %163, %162 : vector<8x128xf32>
    %165 = arith.divf %163, %164 : vector<8x128xf32>
    %166 = arith.mulf %158, %165 : vector<8x128xf32>
    %167 = arith.truncf %166 : vector<8x128xf32> to vector<8x128xbf16>
    %c0_56 = arith.constant 0 : index
    %c0_57 = arith.constant 0 : index
    %168 = vector.load %arg13[%c0_56, %c0_57] : memref<128x32xbf16, #tpu.memory_space<vmem>>, vector<128x32xbf16>
    %cst_58 = arith.constant dense<0.000000e+00> : vector<8x32xf32>
    %169 = tpu.matmul %167, %168, %cst_58 {dimension_numbers = #tpu.dot_dimension_numbers<[1], [0], [0], [1], [0, 0, 1, 1], [], []>} : vector<8x128xbf16>, vector<128x32xbf16>, vector<8x32xf32> -> vector<8x32xf32>
    %170 = arith.addf %128, %169 : vector<8x32xf32>
    %c0_59 = arith.constant 0 : index
    %c0_60 = arith.constant 0 : index
    %171 = vector.load %arg14[%c0_59, %c0_60] : memref<1x32xf32, #tpu.memory_space<vmem>>, vector<1x32xf32>
    %172 = vector.broadcast %171 : vector<1x32xf32> to vector<8x32xf32>
    %173 = arith.addf %170, %172 : vector<8x32xf32>
    %174 = vector.shape_cast %173 : vector<8x32xf32> to vector<1x8x32xf32>
    %c0_61 = arith.constant 0 : index
    %c0_62 = arith.constant 0 : index
    %c0_63 = arith.constant 0 : index
    %175 = vector.load %arg15[%c0_61, %c0_62, %c0_63] : memref<1x8x32xf32, #tpu.memory_space<vmem>>, vector<1x8x32xf32>
    tpu.vector_store %arg15[%c0_61, %c0_62, %c0_63], %174 {strides = array<i32>} : memref<1x8x32xf32, #tpu.memory_space<vmem>>, vector<1x8x32xf32>,
    return
  }
  func.func @transform_0(%arg0: i32) -> (i32, i32, i32) {
    %c0_i32 = arith.constant 0 : i32
    %c0_i32_0 = arith.constant 0 : i32
    %c0_i32_1 = arith.constant 0 : i32
    return %arg0, %c0_i32, %c0_i32_0 : i32, i32, i32
  }
  func.func @transform_1(%arg0: i32) -> (i32, i32) {
    %c0_i32 = arith.constant 0 : i32
    %c0_i32_0 = arith.constant 0 : i32
    %c0_i32_1 = arith.constant 0 : i32
    return %c0_i32, %c0_i32_0 : i32, i32
  }
  func.func @transform_2(%arg0: i32) -> (i32, i32) {
    %c0_i32 = arith.constant 0 : i32
    %c0_i32_0 = arith.constant 0 : i32
    %c0_i32_1 = arith.constant 0 : i32
    return %c0_i32, %c0_i32_0 : i32, i32
  }
  func.func @transform_3(%arg0: i32) -> (i32, i32) {
    %c0_i32 = arith.constant 0 : i32
    %c0_i32_0 = arith.constant 0 : i32
    %c0_i32_1 = arith.constant 0 : i32
    return %c0_i32, %c0_i32_0 : i32, i32
  }
  func.func @transform_4(%arg0: i32) -> (i32, i32) {
    %c0_i32 = arith.constant 0 : i32
    %c0_i32_0 = arith.constant 0 : i32
    %c0_i32_1 = arith.constant 0 : i32
    return %c0_i32, %c0_i32_0 : i32, i32
  }
  func.func @transform_5(%arg0: i32) -> (i32, i32) {
    %c0_i32 = arith.constant 0 : i32
    %c0_i32_0 = arith.constant 0 : i32
    %c0_i32_1 = arith.constant 0 : i32
    return %c0_i32, %c0_i32_0 : i32, i32
  }
  func.func @transform_6(%arg0: i32) -> (i32, i32) {
    %c0_i32 = arith.constant 0 : i32
    %c0_i32_0 = arith.constant 0 : i32
    %c0_i32_1 = arith.constant 0 : i32
    return %c0_i32, %c0_i32_0 : i32, i32
  }
  func.func @transform_7(%arg0: i32) -> (i32, i32) {
    %c0_i32 = arith.constant 0 : i32
    %c0_i32_0 = arith.constant 0 : i32
    %c0_i32_1 = arith.constant 0 : i32
    return %c0_i32, %c0_i32_0 : i32, i32
  }
  func.func @transform_8(%arg0: i32) -> (i32, i32) {
    %c0_i32 = arith.constant 0 : i32
    %c0_i32_0 = arith.constant 0 : i32
    %c0_i32_1 = arith.constant 0 : i32
    return %c0_i32, %c0_i32_0 : i32, i32
  }
  func.func @transform_9(%arg0: i32) -> (i32, i32) {
    %c0_i32 = arith.constant 0 : i32
    %c0_i32_0 = arith.constant 0 : i32
    %c0_i32_1 = arith.constant 0 : i32
    return %c0_i32, %c0_i32_0 : i32, i32
  }
  func.func @transform_10(%arg0: i32) -> (i32, i32) {
    %c0_i32 = arith.constant 0 : i32
    %c0_i32_0 = arith.constant 0 : i32
    %c0_i32_1 = arith.constant 0 : i32
    return %c0_i32, %c0_i32_0 : i32, i32
  }
  func.func @transform_11(%arg0: i32) -> (i32, i32) {
    %c0_i32 = arith.constant 0 : i32
    %c0_i32_0 = arith.constant 0 : i32
    %c0_i32_1 = arith.constant 0 : i32
    return %c0_i32, %c0_i32_0 : i32, i32
  }
  func.func @transform_12(%arg0: i32) -> (i32, i32) {
    %c0_i32 = arith.constant 0 : i32
    %c0_i32_0 = arith.constant 0 : i32
    %c0_i32_1 = arith.constant 0 : i32
    return %c0_i32, %c0_i32_0 : i32, i32
  }
  func.func @transform_13(%arg0: i32) -> (i32, i32) {
    %c0_i32 = arith.constant 0 : i32
    %c0_i32_0 = arith.constant 0 : i32
    %c0_i32_1 = arith.constant 0 : i32
    return %c0_i32, %c0_i32_0 : i32, i32
  }
  func.func @transform_14(%arg0: i32) -> (i32, i32, i32) {
    %c0_i32 = arith.constant 0 : i32
    %c0_i32_0 = arith.constant 0 : i32
    %c0_i32_1 = arith.constant 0 : i32
    return %arg0, %c0_i32, %c0_i32_0 : i32, i32, i32
  }
}

</mosaic_0001>

<llo_original>
// kernel: tpu_custom_call.1
$region0: #{tpu_custom_call.1}
  #allocation0 [shape = 'u32[]', space=smem, size = 0x4, offset = 0x4, fixed_abs, tag = 'smem constant byte address 0x4 - core index']
  #allocation1 [shape = 'u32[72,128]{1,0:T(1,128)}', space=vmem, size = 0x9000, scoped, tag = 'internal scratch']
  %s0 = inlined_call_operand.vmem [shape: f32[2,8,32], index: 0, kind: input, shape index: {}]
  %s1 = inlined_call_operand.vmem [shape: f32[8,32], index: 1, kind: input, shape index: {}]
  %s2 = inlined_call_operand.vmem [shape: f32[1,32], index: 2, kind: input, shape index: {}]
  %s3 = inlined_call_operand.vmem [shape: f32[1,32], index: 3, kind: input, shape index: {}]
  %s4 = inlined_call_operand.vmem [shape: bf16[32,96], index: 4, kind: input, shape index: {}]
  %s5 = inlined_call_operand.vmem [shape: f32[1,96], index: 5, kind: input, shape index: {}]
  %s6 = inlined_call_operand.vmem [shape: bf16[32,32], index: 6, kind: input, shape index: {}]
  %s7 = inlined_call_operand.vmem [shape: f32[1,32], index: 7, kind: input, shape index: {}]
  %s8 = inlined_call_operand.vmem [shape: f32[1,32], index: 8, kind: input, shape index: {}]
  %s9 = inlined_call_operand.vmem [shape: f32[1,32], index: 9, kind: input, shape index: {}]
  %s10 = inlined_call_operand.vmem [shape: bf16[32,128], index: 10, kind: input, shape index: {}]
  %s11 = inlined_call_operand.vmem [shape: f32[1,128], index: 11, kind: input, shape index: {}]
  %s12 = inlined_call_operand.vmem [shape: bf16[128,32], index: 12, kind: input, shape index: {}]
  %s13 = inlined_call_operand.vmem [shape: f32[1,32], index: 13, kind: input, shape index: {}]
  %s14 = inlined_call_operand.hbm [shape: f32[2,8,32], index: 14, kind: output, shape index: {}]
  %s15 = sld [smem:[#allocation0]]
  $region89: #{tpu_custom_call.1} parent=0
    _
  %s17 = ssub.s32 1, %s15
  %s18 = scalar_select 0, %s17, %s15
  $region1: #{tpu_custom_call.1} parent=0
    #allocation2 [shape = 'u8[8192]{0}', space=vmem, size = 0x2000, scoped, tag = 'output window, operand 0']
    #allocation3 [shape = 's32[2]{0}', space=sflag, size = 0x8, scoped, tag = 'scoped memory for tpu_custom_call.1']
    %19 = vsyncpa [#allocation3], 0
    %s20 = scalar_lea.sflag [#allocation3], 1
    %21 = vsyncpa %s20, 0
    loop: start=0, step=1, limit=4
    $region2: #{tpu_custom_call.1} parent=1 // loop_pre_header
      _
    $region3: #{tpu_custom_call.1} parent=1 // loop_header
      %s23 = sphi 0, %s27
      %p24 = scmp.ge.s32.totalorder %s23, 4
      %s33 = sphi 0, %s35
      %s36 = sphi 0, %s33
      %s37 = sphi 0, %s36
      %s53 = sphi 0, %s37
      %s57 = sphi 0, %s57
      %s59 = sphi 0, %s57
      %s60 = sphi 0, %s59
      %s74 = sphi 0, %s60
      %s78 = sphi 0, %s78
      %s80 = sphi 0, %s78
      %s81 = sphi 0, %s80
      %s95 = sphi 0, %s81
      %s99 = sphi 0, %s99
      %s101 = sphi 0, %s99
      %s102 = sphi 0, %s101
      %s116 = sphi 0, %s102
      %s120 = sphi 0, %s120
      %s122 = sphi 0, %s120
      %s123 = sphi 0, %s122
      %s137 = sphi 0, %s123
      %s141 = sphi 0, %s141
      %s143 = sphi 0, %s141
      %s144 = sphi 0, %s143
      %s158 = sphi 0, %s144
      %s162 = sphi 0, %s162
      %s164 = sphi 0, %s162
      %s165 = sphi 0, %s164
      %s179 = sphi 0, %s165
      %s183 = sphi 0, %s183
      %s185 = sphi 0, %s183
      %s186 = sphi 0, %s185
      %s200 = sphi 0, %s186
      %s204 = sphi 0, %s204
      %s206 = sphi 0, %s204
      %s207 = sphi 0, %s206
      %s221 = sphi 0, %s207
      %s225 = sphi 0, %s225
      %s227 = sphi 0, %s225
      %s228 = sphi 0, %s227
      %s242 = sphi 0, %s228
      %s246 = sphi 0, %s246
      %s248 = sphi 0, %s246
      %s249 = sphi 0, %s248
      %s263 = sphi 0, %s249
      %s267 = sphi 0, %s267
      %s269 = sphi 0, %s267
      %s270 = sphi 0, %s269
      %s284 = sphi 0, %s270
      %s288 = sphi 0, %s288
      %s290 = sphi 0, %s288
      %s291 = sphi 0, %s290
      %s305 = sphi 0, %s291
      %s309 = sphi 0, %s309
      %s311 = sphi 0, %s309
      %s312 = sphi 0, %s311
      %s326 = sphi 0, %s312
      %s332 = sphi 0, %s334
      %s335 = sphi 0, %s332
      %s336 = sphi 0, %s335
      %s352 = sphi 0, %s336
    $region4: #{tpu_custom_call.1} parent=1 // loop_header_branch
      %26 = sbr.rel (%p24) target = $region8
    $region5: #{tpu_custom_call.1} parent=1 // loop_body
      %s28 = ssub.s32 %s23, 1
      %s29 = ssub.s32 %s23, 2
      %s30 = sadd.s32 %s23, 1
      %s31 = ssub.s32 %s23, %s30
      %p32 = scmp.eq.s32.totalorder %s31, 0
      %s34 = sadd.s32 %s33, 1
      %s35 = scalar_select %p32, %s33, %s34
      %p38 = pneg %p32
      %p39 = scmp.eq.s32.totalorder %s23, 1
      %p40 = por %p38, %p39
      %p41 = scmp.ne.s32.totalorder %s33, %s36
      %p42 = scmp.eq.s32.totalorder %s23, 0
      %p43 = por %p41, %p42
      %p44 = scmp.ne.s32.totalorder %s33, %s36
      %p45 = scmp.eq.s32.totalorder %s28, 1
      %p46 = por %p44, %p45
      %p47 = scmp.ne.s32.totalorder %s36, %s37
      %p48 = scmp.eq.s32.totalorder %s28, 0
      %p49 = por %p47, %p48
      %p50 = scmp.ne.s32.totalorder %s36, %s37
      %p51 = scmp.eq.s32.totalorder %s29, 1
      %p52 = por %p50, %p51
      %p54 = scmp.ne.s32.totalorder %s37, %s53
      %p55 = scmp.eq.s32.totalorder %s29, 0
      %p56 = por %p54, %p55
      %s58 = sadd.s32 %s57, 1
      %p61 = scmp.eq.s32.totalorder %s23, 1
      %p62 = scmp.ne.s32.totalorder %s57, %s59
      %p63 = scmp.eq.s32.totalorder %s23, 0
      %p64 = por %p62, %p63
      %p65 = scmp.ne.s32.totalorder %s57, %s59
      %p66 = scmp.eq.s32.totalorder %s28, 1
      %p67 = por %p65, %p66
      %p68 = scmp.ne.s32.totalorder %s59, %s60
      %p69 = scmp.eq.s32.totalorder %s28, 0
      %p70 = por %p68, %p69
      %p71 = scmp.ne.s32.totalorder %s59, %s60
      %p72 = scmp.eq.s32.totalorder %s29, 1
      %p73 = por %p71, %p72
      %p75 = scmp.ne.s32.totalorder %s60, %s74
      %p76 = scmp.eq.s32.totalorder %s29, 0
      %p77 = por %p75, %p76
      %s79 = sadd.s32 %s78, 1
      %p82 = scmp.eq.s32.totalorder %s23, 1
      %p83 = scmp.ne.s32.totalorder %s78, %s80
      %p84 = scmp.eq.s32.totalorder %s23, 0
      %p85 = por %p83, %p84
      %p86 = scmp.ne.s32.totalorder %s78, %s80
      %p87 = scmp.eq.s32.totalorder %s28, 1
      %p88 = por %p86, %p87
      %p89 = scmp.ne.s32.totalorder %s80, %s81
      %p90 = scmp.eq.s32.totalorder %s28, 0
      %p91 = por %p89, %p90
      %p92 = scmp.ne.s32.totalorder %s80, %s81
      %p93 = scmp.eq.s32.totalorder %s29, 1
      %p94 = por %p92, %p93
      %p96 = scmp.ne.s32.totalorder %s81, %s95
      %p97 = scmp.eq.s32.totalorder %s29, 0
      %p98 = por %p96, %p97
      %s100 = sadd.s32 %s99, 1
      %p103 = scmp.eq.s32.totalorder %s23, 1
      %p104 = scmp.ne.s32.totalorder %s99, %s101
      %p105 = scmp.eq.s32.totalorder %s23, 0
      %p106 = por %p104, %p105
      %p107 = scmp.ne.s32.totalorder %s99, %s101
      %p108 = scmp.eq.s32.totalorder %s28, 1
      %p109 = por %p107, %p108
      %p110 = scmp.ne.s32.totalorder %s101, %s102
      %p111 = scmp.eq.s32.totalorder %s28, 0
      %p112 = por %p110, %p111
      %p113 = scmp.ne.s32.totalorder %s101, %s102
      %p114 = scmp.eq.s32.totalorder %s29, 1
      %p115 = por %p113, %p114
      %p117 = scmp.ne.s32.totalorder %s102, %s116
      %p118 = scmp.eq.s32.totalorder %s29, 0
      %p119 = por %p117, %p118
      %s121 = sadd.s32 %s120, 1
      %p124 = scmp.eq.s32.totalorder %s23, 1
      %p125 = scmp.ne.s32.totalorder %s120, %s122
      %p126 = scmp.eq.s32.totalorder %s23, 0
      %p127 = por %p125, %p126
      %p128 = scmp.ne.s32.totalorder %s120, %s122
      %p129 = scmp.eq.s32.totalorder %s28, 1
      %p130 = por %p128, %p129
      %p131 = scmp.ne.s32.totalorder %s122, %s123
      %p132 = scmp.eq.s32.totalorder %s28, 0
      %p133 = por %p131, %p132
      %p134 = scmp.ne.s32.totalorder %s122, %s123
      %p135 = scmp.eq.s32.totalorder %s29, 1
      %p136 = por %p134, %p135
      %p138 = scmp.ne.s32.totalorder %s123, %s137
      %p139 = scmp.eq.s32.totalorder %s29, 0
      %p140 = por %p138, %p139
      %s142 = sadd.s32 %s141, 1
      %p145 = scmp.eq.s32.totalorder %s23, 1
      %p146 = scmp.ne.s32.totalorder %s141, %s143
      %p147 = scmp.eq.s32.totalorder %s23, 0
      %p148 = por %p146, %p147
      %p149 = scmp.ne.s32.totalorder %s141, %s143
      %p150 = scmp.eq.s32.totalorder %s28, 1
      %p151 = por %p149, %p150
      %p152 = scmp.ne.s32.totalorder %s143, %s144
      %p153 = scmp.eq.s32.totalorder %s28, 0
      %p154 = por %p152, %p153
      %p155 = scmp.ne.s32.totalorder %s143, %s144
      %p156 = scmp.eq.s32.totalorder %s29, 1
      %p157 = por %p155, %p156
      %p159 = scmp.ne.s32.totalorder %s144, %s158
      %p160 = scmp.eq.s32.totalorder %s29, 0
      %p161 = por %p159, %p160
      %s163 = sadd.s32 %s162, 1
      %p166 = scmp.eq.s32.totalorder %s23, 1
      %p167 = scmp.ne.s32.totalorder %s162, %s164
      %p168 = scmp.eq.s32.totalorder %s23, 0
      %p169 = por %p167, %p168
      %p170 = scmp.ne.s32.totalorder %s162, %s164
      %p171 = scmp.eq.s32.totalorder %s28, 1
      %p172 = por %p170, %p171
      %p173 = scmp.ne.s32.totalorder %s164, %s165
      %p174 = scmp.eq.s32.totalorder %s28, 0
      %p175 = por %p173, %p174
      %p176 = scmp.ne.s32.totalorder %s164, %s165
      %p177 = scmp.eq.s32.totalorder %s29, 1
      %p178 = por %p176, %p177
      %p180 = scmp.ne.s32.totalorder %s165, %s179
      %p181 = scmp.eq.s32.totalorder %s29, 0
      %p182 = por %p180, %p181
      %s184 = sadd.s32 %s183, 1
      %p187 = scmp.eq.s32.totalorder %s23, 1
      %p188 = scmp.ne.s32.totalorder %s183, %s185
      %p189 = scmp.eq.s32.totalorder %s23, 0
      %p190 = por %p188, %p189
      %p191 = scmp.ne.s32.totalorder %s183, %s185
      %p192 = scmp.eq.s32.totalorder %s28, 1
      %p193 = por %p191, %p192
      %p194 = scmp.ne.s32.totalorder %s185, %s186
      %p195 = scmp.eq.s32.totalorder %s28, 0
      %p196 = por %p194, %p195
      %p197 = scmp.ne.s32.totalorder %s185, %s186
      %p198 = scmp.eq.s32.totalorder %s29, 1
      %p199 = por %p197, %p198
      %p201 = scmp.ne.s32.totalorder %s186, %s200
      %p202 = scmp.eq.s32.totalorder %s29, 0
      %p203 = por %p201, %p202
      %s205 = sadd.s32 %s204, 1
      %p208 = scmp.eq.s32.totalorder %s23, 1
      %p209 = scmp.ne.s32.totalorder %s204, %s206
      %p210 = scmp.eq.s32.totalorder %s23, 0
      %p211 = por %p209, %p210
      %p212 = scmp.ne.s32.totalorder %s204, %s206
      %p213 = scmp.eq.s32.totalorder %s28, 1
      %p214 = por %p212, %p213
      %p215 = scmp.ne.s32.totalorder %s206, %s207
      %p216 = scmp.eq.s32.totalorder %s28, 0
      %p217 = por %p215, %p216
      %p218 = scmp.ne.s32.totalorder %s206, %s207
      %p219 = scmp.eq.s32.totalorder %s29, 1
      %p220 = por %p218, %p219
      %p222 = scmp.ne.s32.totalorder %s207, %s221
      %p223 = scmp.eq.s32.totalorder %s29, 0
      %p224 = por %p222, %p223
      %s226 = sadd.s32 %s225, 1
      %p229 = scmp.eq.s32.totalorder %s23, 1
      %p230 = scmp.ne.s32.totalorder %s225, %s227
      %p231 = scmp.eq.s32.totalorder %s23, 0
      %p232 = por %p230, %p231
      %p233 = scmp.ne.s32.totalorder %s225, %s227
      %p234 = scmp.eq.s32.totalorder %s28, 1
      %p235 = por %p233, %p234
      %p236 = scmp.ne.s32.totalorder %s227, %s228
      %p237 = scmp.eq.s32.totalorder %s28, 0
      %p238 = por %p236, %p237
      %p239 = scmp.ne.s32.totalorder %s227, %s228
      %p240 = scmp.eq.s32.totalorder %s29, 1
      %p241 = por %p239, %p240
      %p243 = scmp.ne.s32.totalorder %s228, %s242
      %p244 = scmp.eq.s32.totalorder %s29, 0
      %p245 = por %p243, %p244
      %s247 = sadd.s32 %s246, 1
      %p250 = scmp.eq.s32.totalorder %s23, 1
      %p251 = scmp.ne.s32.totalorder %s246, %s248
      %p252 = scmp.eq.s32.totalorder %s23, 0
      %p253 = por %p251, %p252
      %p254 = scmp.ne.s32.totalorder %s246, %s248
      %p255 = scmp.eq.s32.totalorder %s28, 1
      %p256 = por %p254, %p255
      %p257 = scmp.ne.s32.totalorder %s248, %s249
      %p258 = scmp.eq.s32.totalorder %s28, 0
      %p259 = por %p257, %p258
      %p260 = scmp.ne.s32.totalorder %s248, %s249
      %p261 = scmp.eq.s32.totalorder %s29, 1
      %p262 = por %p260, %p261
      %p264 = scmp.ne.s32.totalorder %s249, %s263
      %p265 = scmp.eq.s32.totalorder %s29, 0
      %p266 = por %p264, %p265
      %s268 = sadd.s32 %s267, 1
      %p271 = scmp.eq.s32.totalorder %s23, 1
      %p272 = scmp.ne.s32.totalorder %s267, %s269
      %p273 = scmp.eq.s32.totalorder %s23, 0
      %p274 = por %p272, %p273
      %p275 = scmp.ne.s32.totalorder %s267, %s269
      %p276 = scmp.eq.s32.totalorder %s28, 1
      %p277 = por %p275, %p276
      %p278 = scmp.ne.s32.totalorder %s269, %s270
      %p279 = scmp.eq.s32.totalorder %s28, 0
      %p280 = por %p278, %p279
      %p281 = scmp.ne.s32.totalorder %s269, %s270
      %p282 = scmp.eq.s32.totalorder %s29, 1
      %p283 = por %p281, %p282
      %p285 = scmp.ne.s32.totalorder %s270, %s284
      %p286 = scmp.eq.s32.totalorder %s29, 0
      %p287 = por %p285, %p286
      %s289 = sadd.s32 %s288, 1
      %p292 = scmp.eq.s32.totalorder %s23, 1
      %p293 = scmp.ne.s32.totalorder %s288, %s290
      %p294 = scmp.eq.s32.totalorder %s23, 0
      %p295 = por %p293, %p294
      %p296 = scmp.ne.s32.totalorder %s288, %s290
      %p297 = scmp.eq.s32.totalorder %s28, 1
      %p298 = por %p296, %p297
      %p299 = scmp.ne.s32.totalorder %s290, %s291
      %p300 = scmp.eq.s32.totalorder %s28, 0
      %p301 = por %p299, %p300
      %p302 = scmp.ne.s32.totalorder %s290, %s291
      %p303 = scmp.eq.s32.totalorder %s29, 1
      %p304 = por %p302, %p303
      %p306 = scmp.ne.s32.totalorder %s291, %s305
      %p307 = scmp.eq.s32.totalorder %s29, 0
      %p308 = por %p306, %p307
      %s310 = sadd.s32 %s309, 1
      %p313 = scmp.eq.s32.totalorder %s23, 1
      %p314 = scmp.ne.s32.totalorder %s309, %s311
      %p315 = scmp.eq.s32.totalorder %s23, 0
      %p316 = por %p314, %p315
      %p317 = scmp.ne.s32.totalorder %s309, %s311
      %p318 = scmp.eq.s32.totalorder %s28, 1
      %p319 = por %p317, %p318
      %p320 = scmp.ne.s32.totalorder %s311, %s312
      %p321 = scmp.eq.s32.totalorder %s28, 0
      %p322 = por %p320, %p321
      %p323 = scmp.ne.s32.totalorder %s311, %s312
      %p324 = scmp.eq.s32.totalorder %s29, 1
      %p325 = por %p323, %p324
      %p327 = scmp.ne.s32.totalorder %s312, %s326
      %p328 = scmp.eq.s32.totalorder %s29, 0
      %p329 = por %p327, %p328
      %s330 = ssub.s32 %s23, %s30
      %p331 = scmp.eq.s32.totalorder %s330, 0
      %s333 = sadd.s32 %s332, 1
      %s334 = scalar_select %p331, %s332, %s333
      %p337 = pneg %p331
      %p338 = scmp.eq.s32.totalorder %s23, 1
      %p339 = por %p337, %p338
      %p340 = scmp.ne.s32.totalorder %s332, %s335
      %p341 = scmp.eq.s32.totalorder %s23, 0
      %p342 = por %p340, %p341
      %p343 = scmp.ne.s32.totalorder %s332, %s335
      %p344 = scmp.eq.s32.totalorder %s28, 1
      %p345 = por %p343, %p344
      %p346 = scmp.ne.s32.totalorder %s335, %s336
      %p347 = scmp.eq.s32.totalorder %s28, 0
      %p348 = por %p346, %p347
      %p349 = scmp.ne.s32.totalorder %s335, %s336
      %p350 = scmp.eq.s32.totalorder %s29, 1
      %p351 = por %p349, %p350
      %p353 = scmp.ne.s32.totalorder %s336, %s352
      %p354 = scmp.eq.s32.totalorder %s29, 0
      %p355 = por %p353, %p354
      %p356 = scmp.le.s32.totalorder 1, %s23
      %p357 = scmp.lt.s32.totalorder %s23, 3
      %p358 = pnand %p356, %p357
      %p359 = pneg %p358
      // Predicated region
      $region9: #{tpu_custom_call.1} parent=5 // pred_check
        _
      $region10: #{tpu_custom_call.1} parent=5 // pred_check_branch
        %361 = sbr.rel (%p358) target = $region12
      $region11: #{tpu_custom_call.1} parent=5 // pred_region
        %s362 = ssub.s32 %s23, 1
        // Predicated region
        $region13: #{tpu_custom_call.1} parent=11 // pred_check
          %p363 = pneg %p70
        $region14: #{tpu_custom_call.1} parent=11 // pred_check_branch
          %365 = sbr.rel (%p363) target = $region16
        $region15: #{tpu_custom_call.1} parent=11 // pred_region
          _
        $region16: #{tpu_custom_call.1} parent=11 // pred_fallthru
          _
        // Predicated region
        $region17: #{tpu_custom_call.1} parent=11 // pred_check
          %p366 = pneg %p91
        $region18: #{tpu_custom_call.1} parent=11 // pred_check_branch
          %368 = sbr.rel (%p366) target = $region20
        $region19: #{tpu_custom_call.1} parent=11 // pred_region
          _
        $region20: #{tpu_custom_call.1} parent=11 // pred_fallthru
          _
        // Predicated region
        $region21: #{tpu_custom_call.1} parent=11 // pred_check
          %p369 = pneg %p112
        $region22: #{tpu_custom_call.1} parent=11 // pred_check_branch
          %371 = sbr.rel (%p369) target = $region24
        $region23: #{tpu_custom_call.1} parent=11 // pred_region
          _
        $region24: #{tpu_custom_call.1} parent=11 // pred_fallthru
          _
        // Predicated region
        $region25: #{tpu_custom_call.1} parent=11 // pred_check
          %p372 = pneg %p133
        $region26: #{tpu_custom_call.1} parent=11 // pred_check_branch
          %374 = sbr.rel (%p372) target = $region28
        $region27: #{tpu_custom_call.1} parent=11 // pred_region
          _
        $region28: #{tpu_custom_call.1} parent=11 // pred_fallthru
          _
        // Predicated region
        $region29: #{tpu_custom_call.1} parent=11 // pred_check
          %p375 = pneg %p154
        $region30: #{tpu_custom_call.1} parent=11 // pred_check_branch
          %377 = sbr.rel (%p375) target = $region32
        $region31: #{tpu_custom_call.1} parent=11 // pred_region
          _
        $region32: #{tpu_custom_call.1} parent=11 // pred_fallthru
          _
        // Predicated region
        $region33: #{tpu_custom_call.1} parent=11 // pred_check
          %p378 = pneg %p175
        $region34: #{tpu_custom_call.1} parent=11 // pred_check_branch
          %380 = sbr.rel (%p378) target = $region36
        $region35: #{tpu_custom_call.1} parent=11 // pred_region
          _
        $region36: #{tpu_custom_call.1} parent=11 // pred_fallthru
          _
        // Predicated region
        $region37: #{tpu_custom_call.1} parent=11 // pred_check
          %p381 = pneg %p196
        $region38: #{tpu_custom_call.1} parent=11 // pred_check_branch
          %383 = sbr.rel (%p381) target = $region40
        $region39: #{tpu_custom_call.1} parent=11 // pred_region
          _
        $region40: #{tpu_custom_call.1} parent=11 // pred_fallthru
          _
        // Predicated region
        $region41: #{tpu_custom_call.1} parent=11 // pred_check
          %p384 = pneg %p217
        $region42: #{tpu_custom_call.1} parent=11 // pred_check_branch
          %386 = sbr.rel (%p384) target = $region44
        $region43: #{tpu_custom_call.1} parent=11 // pred_region
          _
        $region44: #{tpu_custom_call.1} parent=11 // pred_fallthru
          _
        // Predicated region
        $region45: #{tpu_custom_call.1} parent=11 // pred_check
          %p387 = pneg %p238
        $region46: #{tpu_custom_call.1} parent=11 // pred_check_branch
          %389 = sbr.rel (%p387) target = $region48
        $region47: #{tpu_custom_call.1} parent=11 // pred_region
          _
        $region48: #{tpu_custom_call.1} parent=11 // pred_fallthru
          _
        // Predicated region
        $region49: #{tpu_custom_call.1} parent=11 // pred_check
          %p390 = pneg %p259
        $region50: #{tpu_custom_call.1} parent=11 // pred_check_branch
          %392 = sbr.rel (%p390) target = $region52
        $region51: #{tpu_custom_call.1} parent=11 // pred_region
          _
        $region52: #{tpu_custom_call.1} parent=11 // pred_fallthru
          _
        // Predicated region
        $region53: #{tpu_custom_call.1} parent=11 // pred_check
          %p393 = pneg %p280
        $region54: #{tpu_custom_call.1} parent=11 // pred_check_branch
          %395 = sbr.rel (%p393) target = $region56
        $region55: #{tpu_custom_call.1} parent=11 // pred_region
          _
        $region56: #{tpu_custom_call.1} parent=11 // pred_fallthru
          _
        // Predicated region
        $region57: #{tpu_custom_call.1} parent=11 // pred_check
          %p396 = pneg %p301
        $region58: #{tpu_custom_call.1} parent=11 // pred_check_branch
          %398 = sbr.rel (%p396) target = $region60
        $region59: #{tpu_custom_call.1} parent=11 // pred_region
          _
        $region60: #{tpu_custom_call.1} parent=11 // pred_fallthru
          _
        // Predicated region
        $region61: #{tpu_custom_call.1} parent=11 // pred_check
          %p399 = pneg %p322
        $region62: #{tpu_custom_call.1} parent=11 // pred_check_branch
          %401 = sbr.rel (%p399) target = $region64
        $region63: #{tpu_custom_call.1} parent=11 // pred_region
          _
        $region64: #{tpu_custom_call.1} parent=11 // pred_fallthru
          _
      $region12: #{tpu_custom_call.1} parent=5 // pred_fallthru
        _
      %p402 = scmp.lt.s32.totalorder %s23, 2
      // Predicated region
      $region65: #{tpu_custom_call.1} parent=5 // pred_check
        %p403 = pneg %p402
      $region66: #{tpu_custom_call.1} parent=5 // pred_check_branch
        %405 = sbr.rel (%p403) target = $region68
      $region67: #{tpu_custom_call.1} parent=5 // pred_region
        // Predicated region
        $region69: #{tpu_custom_call.1} parent=67 // pred_check
          %p406 = pneg %p43
        $region70: #{tpu_custom_call.1} parent=67 // pred_check_branch
          %408 = sbr.rel (%p406) target = $region72
        $region71: #{tpu_custom_call.1} parent=67 // pred_region
          %p409 = scmp.lt.s32.totalorder %s23, 1
          %s410 = scalar_select %p409, %s23, 1
          %s411 = smul.addr %s410, 8
          %s412 = scalar_lea.vmem %s0, %s411
        $region72: #{tpu_custom_call.1} parent=67 // pred_fallthru
          _
      $region68: #{tpu_custom_call.1} parent=5 // pred_fallthru
        _
      %p413 = scmp.le.s32.totalorder 1, %s23
      %p414 = scmp.lt.s32.totalorder %s23, 3
      %p415 = pnand %p413, %p414
      %p416 = pneg %p415
      // Predicated region
      $region73: #{tpu_custom_call.1} parent=5 // pred_check
        _
      $region74: #{tpu_custom_call.1} parent=5 // pred_check_branch
        %418 = sbr.rel (%p415) target = $region76
      $region75: #{tpu_custom_call.1} parent=5 // pred_region
        %s419 = ssub.s32 %s23, 1
        %p420 = scmp.lt.s32.totalorder %s28, 1
        %s421 = scalar_select %p420, %s28, 1
        %s422 = smul.addr %s421, 8
        %s423 = scalar_lea.vmem %s0, %s422
        %p424 = pneg %p49
        %p425 = pneg %p46
        %p426 = pneg %p70
        %p427 = pneg %p67
        %p428 = pneg %p91
        %p429 = pneg %p88
        %p430 = pneg %p112
        %p431 = pneg %p109
        %p432 = pneg %p133
        %p433 = pneg %p130
        %p434 = pneg %p154
        %p435 = pneg %p151
        %p436 = pneg %p175
        %p437 = pneg %p172
        %p438 = pneg %p196
        %p439 = pneg %p193
        %p440 = pneg %p217
        %p441 = pneg %p214
        %p442 = pneg %p238
        %p443 = pneg %p235
        %p444 = pneg %p259
        %p445 = pneg %p256
        %p446 = pneg %p280
        %p447 = pneg %p277
        %p448 = pneg %p301
        %p449 = pneg %p298
        %p450 = pneg %p322
        %p451 = pneg %p319
        %p452 = pneg %p348
        %p453 = pneg %p345
        %s454 = sand.u32 %s335, 1
        %s455 = scalar_lea.sflag [#allocation3], %s454
        %s456 = sand.u32 %s335, 1
        %s457 = smul.addr %s456, 8
        %s458 = scalar_lea.vmem [#allocation2], %s457
        %p459 = scmp.lt.s32.totalorder %s28, 1
        %s460 = scalar_select %p459, %s28, 1
        %s461 = smul.addr %s460, 8
        %s462 = scalar_lea.vmem %s0, %s461
        %v464 = vld [vmem:[%s462] sm:$0xff]
        %v465 = vld [vmem:[%s1] sm:$0xff]
        %v466 = vadd.f32 %v464, %v465
        %v467 = vld [vmem:[%s2] sm:$0x1]
        %v468 = vld [vmem:[%s3] sm:$0x1]
        %vm469 = vcmask 261120
        %v470 = vsel %vm469, %v466, 0.0
        %471 = vadd.xlane.f32.xlu0 %v470
        %v472 = vpop.xlane.xlu0 %471
        %v473 = vrcp.pop 32.0
        %v474 = vmul.f32 32.0, %v473
        %v475 = vsub.f32 1.0, %v474
        %v476 = vmul.f32 %v473, %v475
        %v477 = vadd.f32 %v473, %v476
        %vm478 = vweird.f32 %v473
        %v479 = vsel %vm478, %v473, %v477
        %v480 = vmul.f32 %v472, %v479
        %v481 = vsub.f32 %v466, %v480
        %v482 = vmul.f32 %v481, %v481
        %v483 = vsel %vm469, %v482, 0.0
        %484 = vadd.xlane.f32.xlu0 %v483
        %v485 = vpop.xlane.xlu0 %484
        %v486 = vmul.f32 %v485, %v479
        %v487 = vadd.f32 %v486, 1e-05
        %v488 = vrsqrt.pop %v487
        %v489 = vmul.f32 %v488, %v487
        %v490 = vmul.f32 %v489, %v488
        %v491 = vmul.f32 0.5, %v490
        %v492 = vsub.f32 1.5, %v491
        %v493 = vmul.f32 %v488, %v492
        %vm494 = vweird.f32 %v487
        %vm495 = vweird.f32 %v488
        %vm496 = vmor %vm494, %vm495
        %v497 = vsel %vm496, %v488, %v493
        %v498 = vmul.f32 %v481, %v497
        %v500 = vperm.slane %v467, 0
        %v502 = vmul.f32 %v498, %v500
        %v504 = vperm.slane %v468, 0
        %v506 = vadd.f32 %v502, %v504
        %v507 = vpack.c.bf16 %v506, %v506
        %v508 = vld [vmem:[%s4] sm:$0xf]
        %v509 = vld [vmem:[%s4 + $0x4] sm:$0xf]
        %v510 = vld [vmem:[%s4 + $0x8] sm:$0xf]
        %v511 = vld [vmem:[%s4 + $0xc] sm:$0xf]
        %v512 = vld [vmem:[%s5] sm:$0x1]
        %v514 = vperm.slane %v512, 0
        %v520 = vunpack.c.l.b16 %v508
        %v521 = vunpack.c.l.b16 %v509
        %v522 = vunpack.c.l.b16 %v510
        %v523 = vunpack.c.l.b16 %v511
        %v524 = vpack.c.b16 %v521, %v520
        %v525 = vpack.c.b16 %v523, %v522
        %v529 = vsel %vm469, %v507, 0
        %531 = vmatpush.bf16.msra.mxu0 0
        %532 = vmatpush.bf16.msra.mxu0 0
        %533 = vmatpush.bf16.msra.mxu0 0
        %534 = vmatpush.bf16.msra.mxu0 0
        %535 = vmatpush.bf16.msra.mxu0 0
        %536 = vmatpush.bf16.msra.mxu0 0
        %537 = vmatpush.bf16.msra.mxu0 %v525
        %538 = vmatpush.bf16.msra.mxu0 %v524
        %539 = vmatmul.bf16.gmra.mxu0 %v529
        %v540 = vpop.f32.mrf.mxu0
        %v541 = vadd.f32 %v514, %v540
        %v542 = vpop.f32.mrf.mxu0
        %543 = vdwg.mxu0
        %v544 = vlaneseq
        %v545 = vshrl.u32 %v544, 7
        %v546 = vlaneseq
        %v547 = vand.u32 %v546, 127
        %vm548 = vcmp.gt.s32.totalorder %v547, %v545
        %v549 = vsel %vm548, -1e+30, 0.0
        %v550 = vpack.c.bf16 %v541, %v541
        %552 = vrot.lane.b32.xlu0 %v550, 96
        %v553 = vpop.permute.xlu0 %552
        %vm554 = vcmask 64512
        %v556 = vsel %vm554, %v550, 0
        %v559 = vsel %vm554, %v553, 0
        %561 = vmatpush.bf16.xpose.msra.mxu0 0
        %562 = vmatpush.bf16.xpose.msra.mxu0 0
        %563 = vmatpush.bf16.xpose.msra.mxu0 0
        %564 = vmatpush.bf16.xpose.msra.mxu0 0
        %565 = vmatpush.bf16.xpose.msra.mxu0 0
        %566 = vmatpush.bf16.xpose.msra.mxu0 0
        %567 = vmatpush.bf16.xpose.msra.mxu0 0
        %568 = vmatpush.bf16.xpose.msra.mxu0 %v559
        %569 = vmatmul.bf16.gmra.mxu0 %v556
        %v570 = vpop.f32.mrf.mxu0
        %v571 = vadd.f32 %v549, %v570
        %v572 = vpop.f32.mrf.mxu0
        %573 = vdwg.mxu0
        %v574 = vsel %vm554, %v571, -inf
        %575 = vmax.xlane.f32.xlu0 %v574
        %v576 = vpop.xlane.xlu0 %575
        %v577 = vsub.f32 %v571, %v576
        %v578 = vmul.f32 %v577, 1.442695
        %v579 = vpow.pop %v578
        %v580 = vsel %vm554, %v579, 0.0
        %581 = vadd.xlane.f32.xlu0 %v580
        %v582 = vpop.xlane.xlu0 %581
        %v583 = vrcp.pop %v582
        %v584 = vmul.f32 %v579, %v583
        %v585 = vpack.c.bf16 %v584, %v584
        %586 = vrot.lane.b32.xlu0 %v550, 64
        %v587 = vpop.permute.xlu0 %586
        %v589 = vsel %vm554, %v585, 0
        %vm591 = vcmask 1043456
        %v593 = vsel %vm591, %v587, 0
        %595 = vmatpush.bf16.msra.mxu0 0
        %596 = vmatpush.bf16.msra.mxu0 0
        %597 = vmatpush.bf16.msra.mxu0 0
        %598 = vmatpush.bf16.msra.mxu0 0
        %599 = vmatpush.bf16.msra.mxu0 0
        %600 = vmatpush.bf16.msra.mxu0 0
        %601 = vmatpush.bf16.msra.mxu0 0
        %602 = vmatpush.bf16.msra.mxu0 %v593
        %603 = vmatmul.bf16.gmra.mxu0 %v589
        %v604 = vpop.f32.mrf.mxu0
        %v605 = vadd.f32 0.0, %v604
        %v606 = vpop.f32.mrf.mxu0
        %607 = vdwg.mxu0
        %608 = vrot.lane.b32.xlu0 %v550, 120
        %v609 = vpop.permute.xlu0 %608
        %610 = vrot.lane.b32.xlu0 %v550, 88
        %v611 = vpop.permute.xlu0 %610
        %v613 = vsel %vm554, %v609, 0
        %v616 = vsel %vm554, %v611, 0
        %618 = vmatpush.bf16.xpose.msra.mxu0 0
        %619 = vmatpush.bf16.xpose.msra.mxu0 0
        %620 = vmatpush.bf16.xpose.msra.mxu0 0
        %621 = vmatpush.bf16.xpose.msra.mxu0 0
        %622 = vmatpush.bf16.xpose.msra.mxu0 0
        %623 = vmatpush.bf16.xpose.msra.mxu0 0
        %624 = vmatpush.bf16.xpose.msra.mxu0 0
        %625 = vmatpush.bf16.xpose.msra.mxu0 %v616
        %626 = vmatmul.bf16.gmra.mxu0 %v613
        %v627 = vpop.f32.mrf.mxu0
        %v628 = vadd.f32 %v549, %v627
        %v629 = vpop.f32.mrf.mxu0
        %630 = vdwg.mxu0
        %v631 = vsel %vm554, %v628, -inf
        %632 = vmax.xlane.f32.xlu0 %v631
        %v633 = vpop.xlane.xlu0 %632
        %v634 = vsub.f32 %v628, %v633
        %v635 = vmul.f32 %v634, 1.442695
        %v636 = vpow.pop %v635
        %v637 = vsel %vm554, %v636, 0.0
        %638 = vadd.xlane.f32.xlu0 %v637
        %v639 = vpop.xlane.xlu0 %638
        %v640 = vrcp.pop %v639
        %v641 = vmul.f32 %v636, %v640
        %v642 = vpack.c.bf16 %v641, %v641
        %643 = vrot.lane.b32.xlu0 %v550, 56
        %v644 = vpop.permute.xlu0 %643
        %v646 = vsel %vm554, %v642, 0
        %v649 = vsel %vm591, %v644, 0
        %651 = vmatpush.bf16.msra.mxu0 0
        %652 = vmatpush.bf16.msra.mxu0 0
        %653 = vmatpush.bf16.msra.mxu0 0
        %654 = vmatpush.bf16.msra.mxu0 0
        %655 = vmatpush.bf16.msra.mxu0 0
        %656 = vmatpush.bf16.msra.mxu0 0
        %657 = vmatpush.bf16.msra.mxu0 0
        %658 = vmatpush.bf16.msra.mxu0 %v649
        %659 = vmatmul.bf16.gmra.mxu0 %v646
        %v660 = vpop.f32.mrf.mxu0
        %v661 = vadd.f32 0.0, %v660
        %v662 = vpop.f32.mrf.mxu0
        %663 = vdwg.mxu0
        %664 = vrot.lane.b32.xlu0 %v550, 112
        %v665 = vpop.permute.xlu0 %664
        %666 = vrot.lane.b32.xlu0 %v550, 80
        %v667 = vpop.permute.xlu0 %666
        %v669 = vsel %vm554, %v665, 0
        %v672 = vsel %vm554, %v667, 0
        %674 = vmatpush.bf16.xpose.msra.mxu0 0
        %675 = vmatpush.bf16.xpose.msra.mxu0 0
        %676 = vmatpush.bf16.xpose.msra.mxu0 0
        %677 = vmatpush.bf16.xpose.msra.mxu0 0
        %678 = vmatpush.bf16.xpose.msra.mxu0 0
        %679 = vmatpush.bf16.xpose.msra.mxu0 0
        %680 = vmatpush.bf16.xpose.msra.mxu0 0
        %681 = vmatpush.bf16.xpose.msra.mxu0 %v672
        %682 = vmatmul.bf16.gmra.mxu0 %v669
        %v683 = vpop.f32.mrf.mxu0
        %v684 = vadd.f32 %v549, %v683
        %v685 = vpop.f32.mrf.mxu0
        %686 = vdwg.mxu0
        %v687 = vsel %vm554, %v684, -inf
        %688 = vmax.xlane.f32.xlu0 %v687
        %v689 = vpop.xlane.xlu0 %688
        %v690 = vsub.f32 %v684, %v689
        %v691 = vmul.f32 %v690, 1.442695
        %v692 = vpow.pop %v691
        %v693 = vsel %vm554, %v692, 0.0
        %694 = vadd.xlane.f32.xlu0 %v693
        %v695 = vpop.xlane.xlu0 %694
        %v696 = vrcp.pop %v695
        %v697 = vmul.f32 %v692, %v696
        %v698 = vpack.c.bf16 %v697, %v697
        %699 = vrot.lane.b32.xlu0 %v550, 48
        %v700 = vpop.permute.xlu0 %699
        %v702 = vsel %vm554, %v698, 0
        %v705 = vsel %vm591, %v700, 0
        %707 = vmatpush.bf16.msra.mxu0 0
        %708 = vmatpush.bf16.msra.mxu0 0
        %709 = vmatpush.bf16.msra.mxu0 0
        %710 = vmatpush.bf16.msra.mxu0 0
        %711 = vmatpush.bf16.msra.mxu0 0
        %712 = vmatpush.bf16.msra.mxu0 0
        %713 = vmatpush.bf16.msra.mxu0 0
        %714 = vmatpush.bf16.msra.mxu0 %v705
        %715 = vmatmul.bf16.gmra.mxu0 %v702
        %v716 = vpop.f32.mrf.mxu0
        %v717 = vadd.f32 0.0, %v716
        %v718 = vpop.f32.mrf.mxu0
        %719 = vdwg.mxu0
        %720 = vrot.lane.b32.xlu0 %v550, 104
        %v721 = vpop.permute.xlu0 %720
        %722 = vrot.lane.b32.xlu0 %v550, 72
        %v723 = vpop.permute.xlu0 %722
        %v725 = vsel %vm554, %v721, 0
        %v728 = vsel %vm554, %v723, 0
        %730 = vmatpush.bf16.xpose.msra.mxu0 0
        %731 = vmatpush.bf16.xpose.msra.mxu0 0
        %732 = vmatpush.bf16.xpose.msra.mxu0 0
        %733 = vmatpush.bf16.xpose.msra.mxu0 0
        %734 = vmatpush.bf16.xpose.msra.mxu0 0
        %735 = vmatpush.bf16.xpose.msra.mxu0 0
        %736 = vmatpush.bf16.xpose.msra.mxu0 0
        %737 = vmatpush.bf16.xpose.msra.mxu0 %v728
        %738 = vmatmul.bf16.gmra.mxu0 %v725
        %v739 = vpop.f32.mrf.mxu0
        %v740 = vadd.f32 %v549, %v739
        %v741 = vpop.f32.mrf.mxu0
        %742 = vdwg.mxu0
        %v743 = vsel %vm554, %v740, -inf
        %744 = vmax.xlane.f32.xlu0 %v743
        %v745 = vpop.xlane.xlu0 %744
        %v746 = vsub.f32 %v740, %v745
        %v747 = vmul.f32 %v746, 1.442695
        %v748 = vpow.pop %v747
        %v749 = vsel %vm554, %v748, 0.0
        %750 = vadd.xlane.f32.xlu0 %v749
        %v751 = vpop.xlane.xlu0 %750
        %v752 = vrcp.pop %v751
        %v753 = vmul.f32 %v748, %v752
        %v754 = vpack.c.bf16 %v753, %v753
        %755 = vrot.lane.b32.xlu0 %v550, 40
        %v756 = vpop.permute.xlu0 %755
        %v758 = vsel %vm554, %v754, 0
        %v761 = vsel %vm591, %v756, 0
        %763 = vmatpush.bf16.msra.mxu0 0
        %764 = vmatpush.bf16.msra.mxu0 0
        %765 = vmatpush.bf16.msra.mxu0 0
        %766 = vmatpush.bf16.msra.mxu0 0
        %767 = vmatpush.bf16.msra.mxu0 0
        %768 = vmatpush.bf16.msra.mxu0 0
        %769 = vmatpush.bf16.msra.mxu0 0
        %770 = vmatpush.bf16.msra.mxu0 %v761
        %771 = vmatmul.bf16.gmra.mxu0 %v758
        %v772 = vpop.f32.mrf.mxu0
        %v773 = vadd.f32 0.0, %v772
        %v774 = vpop.f32.mrf.mxu0
        %775 = vdwg.mxu0
        %777 = vrot.lane.b32.xlu0 %v661, 8
        %v778 = vpop.permute.xlu0 %777
        %781 = vrot.lane.b32.xlu0 %v717, 16
        %v782 = vpop.permute.xlu0 %781
        %785 = vrot.lane.b32.xlu0 %v773, 24
        %v786 = vpop.permute.xlu0 %785
        %v788 = vsel %vm554, %v605, %v778
        %vm789 = vcmask 130048
        %v790 = vsel %vm789, %v788, %v782
        %vm791 = vcmask 195584
        %v792 = vsel %vm791, %v790, %v786
        %v793 = vpack.c.bf16 %v792, %v792
        %v794 = vld [vmem:[%s6] sm:$0xf]
        %v795 = vld [vmem:[%s6 + $0x4] sm:$0xf]
        %v796 = vld [vmem:[%s6 + $0x8] sm:$0xf]
        %v797 = vld [vmem:[%s6 + $0xc] sm:$0xf]
        %v802 = vunpack.c.l.b16 %v794
        %v803 = vunpack.c.l.b16 %v795
        %v804 = vunpack.c.l.b16 %v796
        %v805 = vunpack.c.l.b16 %v797
        %v806 = vpack.c.b16 %v803, %v802
        %v807 = vpack.c.b16 %v805, %v804
        %v811 = vsel %vm469, %v793, 0
        %813 = vmatpush.bf16.msra.mxu0 0
        %814 = vmatpush.bf16.msra.mxu0 0
        %815 = vmatpush.bf16.msra.mxu0 0
        %816 = vmatpush.bf16.msra.mxu0 0
        %817 = vmatpush.bf16.msra.mxu0 0
        %818 = vmatpush.bf16.msra.mxu0 0
        %819 = vmatpush.bf16.msra.mxu0 %v807
        %820 = vmatpush.bf16.msra.mxu0 %v806
        %821 = vmatmul.bf16.gmra.mxu0 %v811
        %v822 = vpop.f32.mrf.mxu0
        %v823 = vadd.f32 0.0, %v822
        %v824 = vpop.f32.mrf.mxu0
        %825 = vdwg.mxu0
        %v826 = vadd.f32 %v466, %v823
        %v827 = vld [vmem:[%s7] sm:$0x1]
        %v829 = vperm.slane %v827, 0
        %v831 = vadd.f32 %v826, %v829
        %v832 = vld [vmem:[%s8] sm:$0x1]
        %v833 = vld [vmem:[%s9] sm:$0x1]
        %v834 = vsel %vm469, %v831, 0.0
        %835 = vadd.xlane.f32.xlu0 %v834
        %v836 = vpop.xlane.xlu0 %835
        %v837 = vmul.f32 %v836, %v479
        %v838 = vsub.f32 %v831, %v837
        %v839 = vmul.f32 %v838, %v838
        %v840 = vsel %vm469, %v839, 0.0
        %841 = vadd.xlane.f32.xlu0 %v840
        %v842 = vpop.xlane.xlu0 %841
        %v843 = vmul.f32 %v842, %v479
        %v844 = vadd.f32 %v843, 1e-05
        %v845 = vrsqrt.pop %v844
        %v846 = vmul.f32 %v845, %v844
        %v847 = vmul.f32 %v846, %v845
        %v848 = vmul.f32 0.5, %v847
        %v849 = vsub.f32 1.5, %v848
        %v850 = vmul.f32 %v845, %v849
        %vm851 = vweird.f32 %v844
        %vm852 = vweird.f32 %v845
        %vm853 = vmor %vm851, %vm852
        %v854 = vsel %vm853, %v845, %v850
        %v855 = vmul.f32 %v838, %v854
        %v857 = vperm.slane %v832, 0
        %v859 = vmul.f32 %v855, %v857
        %v861 = vperm.slane %v833, 0
        %v863 = vadd.f32 %v859, %v861
        %v864 = vpack.c.bf16 %v863, %v863
        %v865 = vld [vmem:[%s10] sm:$0xf]
        %v866 = vld [vmem:[%s10 + $0x4] sm:$0xf]
        %v867 = vld [vmem:[%s10 + $0x8] sm:$0xf]
        %v868 = vld [vmem:[%s10 + $0xc] sm:$0xf]
        %v869 = vld [vmem:[%s11] sm:$0x1]
        %v871 = vperm.slane %v869, 0
        %v877 = vunpack.c.l.b16 %v865
        %v878 = vunpack.c.l.b16 %v866
        %v879 = vunpack.c.l.b16 %v867
        %v880 = vunpack.c.l.b16 %v868
        %v881 = vpack.c.b16 %v878, %v877
        %v882 = vpack.c.b16 %v880, %v879
        %v886 = vsel %vm469, %v864, 0
        %888 = vmatpush.bf16.msra.mxu0 0
        %889 = vmatpush.bf16.msra.mxu0 0
        %890 = vmatpush.bf16.msra.mxu0 0
        %891 = vmatpush.bf16.msra.mxu0 0
        %892 = vmatpush.bf16.msra.mxu0 0
        %893 = vmatpush.bf16.msra.mxu0 0
        %894 = vmatpush.bf16.msra.mxu0 %v882
        %895 = vmatpush.bf16.msra.mxu0 %v881
        %896 = vmatmul.bf16.gmra.mxu0 %v886
        %v897 = vpop.f32.mrf.mxu0
        %v898 = vadd.f32 %v871, %v897
        %v899 = vpop.f32.mrf.mxu0
        %900 = vdwg.mxu0
        %v901 = vmul.f32 %v898, 1.702
        %v902 = vxor.u32 %v901, 2147483648
        %v903 = vmul.f32 %v902, 1.442695
        %v904 = vpow.pop %v903
        %v905 = vadd.f32 %v904, 1.0
        %v906 = vrcp.pop %v905
        %v907 = vmul.f32 %v905, %v906
        %v908 = vsub.f32 1.0, %v907
        %v909 = vmul.f32 %v906, %v908
        %v910 = vadd.f32 %v906, %v909
        %vm911 = vweird.f32 %v905
        %vm912 = vweird.f32 %v906
        %vm913 = vmor %vm911, %vm912
        %v914 = vsel %vm913, %v906, %v910
        %v915 = vand.u32 2147483647, %v905
        %vm916 = vcmp.eq.f32.partialorder %v915, 8.507059e+37
        %v917 = vand.u32 %v905, 2147483648
        %v918 = vor.u32 1.1754944e-38, %v917
        %v919 = vsel %vm916, %v918, %v914
        %v920 = vmul.f32 1.0, %v919
        %v921 = vmul.f32 %v898, %v920
        %v922 = vpack.c.bf16 %v921, %v921
        %v923 = vld [vmem:[%s12] sm:$0xf]
        %v924 = vld [vmem:[%s12 + $0x4] sm:$0xf]
        %v925 = vld [vmem:[%s12 + $0x8] sm:$0xf]
        %v926 = vld [vmem:[%s12 + $0xc] sm:$0xf]
        %v927 = vld [vmem:[%s12 + $0x10] sm:$0xf]
        %v928 = vld [vmem:[%s12 + $0x14] sm:$0xf]
        %v929 = vld [vmem:[%s12 + $0x18] sm:$0xf]
        %v930 = vld [vmem:[%s12 + $0x1c] sm:$0xf]
        %v931 = vld [vmem:[%s12 + $0x20] sm:$0xf]
        %v932 = vld [vmem:[%s12 + $0x24] sm:$0xf]
        %v933 = vld [vmem:[%s12 + $0x28] sm:$0xf]
        %v934 = vld [vmem:[%s12 + $0x2c] sm:$0xf]
        %v935 = vld [vmem:[%s12 + $0x30] sm:$0xf]
        %v936 = vld [vmem:[%s12 + $0x34] sm:$0xf]
        %v937 = vld [vmem:[%s12 + $0x38] sm:$0xf]
        %v938 = vld [vmem:[%s12 + $0x3c] sm:$0xf]
        %v955 = vunpack.c.l.b16 %v923
        %v956 = vunpack.c.l.b16 %v924
        %v957 = vunpack.c.l.b16 %v925
        %v958 = vunpack.c.l.b16 %v926
        %v959 = vunpack.c.l.b16 %v927
        %v960 = vunpack.c.l.b16 %v928
        %v961 = vunpack.c.l.b16 %v929
        %v962 = vunpack.c.l.b16 %v930
        %v963 = vunpack.c.l.b16 %v931
        %v964 = vunpack.c.l.b16 %v932
        %v965 = vunpack.c.l.b16 %v933
        %v966 = vunpack.c.l.b16 %v934
        %v967 = vunpack.c.l.b16 %v935
        %v968 = vunpack.c.l.b16 %v936
        %v969 = vunpack.c.l.b16 %v937
        %v970 = vunpack.c.l.b16 %v938
        %v971 = vpack.c.b16 %v956, %v955
        %v972 = vpack.c.b16 %v958, %v957
        %v973 = vpack.c.b16 %v960, %v959
        %v974 = vpack.c.b16 %v962, %v961
        %v975 = vpack.c.b16 %v964, %v963
        %v976 = vpack.c.b16 %v966, %v965
        %v977 = vpack.c.b16 %v968, %v967
        %v978 = vpack.c.b16 %v970, %v969
        %987 = vmatpush.bf16.msra.mxu0 %v978
        %988 = vmatpush.bf16.msra.mxu0 %v977
        %989 = vmatpush.bf16.msra.mxu0 %v976
        %990 = vmatpush.bf16.msra.mxu0 %v975
        %991 = vmatpush.bf16.msra.mxu0 %v974
        %992 = vmatpush.bf16.msra.mxu0 %v973
        %993 = vmatpush.bf16.msra.mxu0 %v972
        %994 = vmatpush.bf16.msra.mxu0 %v971
        %995 = vmatmul.bf16.gmra.mxu0 %v922
        %v996 = vpop.f32.mrf.mxu0
        %v997 = vadd.f32 0.0, %v996
        %v998 = vpop.f32.mrf.mxu0
        %999 = vdwg.mxu0
        %v1000 = vadd.f32 %v831, %v997
        %v1001 = vld [vmem:[%s13] sm:$0x1]
        %v1003 = vperm.slane %v1001, 0
        %v1005 = vadd.f32 %v1000, %v1003
        %1006 = vst.msk [vmem:[%s458] sm:$0xff] %vm469, %v1005
        %s1007 = sand.u32 %s335, 1
        %s1008 = scalar_lea.sflag [#allocation3], %s1007
        %s1009 = sand.u32 %s335, 1
        %s1010 = smul.addr %s1009, 8
        %s1011 = scalar_lea.vmem [#allocation2], %s1010
        // Predicated region
        $region77: #{tpu_custom_call.1} parent=75 // pred_check
          %p1012 = pneg %p345
        $region78: #{tpu_custom_call.1} parent=75 // pred_check_branch
          %1014 = sbr.rel (%p1012) target = $region80
        $region79: #{tpu_custom_call.1} parent=75 // pred_region
          %1016 = vsyncadd %s1008, 0
          %s1017 = smul.addr %s28, 8
          %s1018 = scalar_lea.hbm %s14, %s1017
          %s1020 = sshll.u32 %s1011, 4
          %s1021 = int_to_ptr.vmem [resolvable:$true] %s1020
          %s1022 = sshll.u32 %s1018, 4
          %s1023 = int_to_ptr.hbm [resolvable:$true] %s1022
          %1025 = dma.vmem_to_hbm [thread:$0]  %s1021, 128, %s1023, %s1008
        $region80: #{tpu_custom_call.1} parent=75 // pred_fallthru
          _
      $region76: #{tpu_custom_call.1} parent=5 // pred_fallthru
        _
      %p1026 = scmp.le.s32.totalorder 2, %s23
      // Predicated region
      $region81: #{tpu_custom_call.1} parent=5 // pred_check
        %p1027 = pneg %p1026
      $region82: #{tpu_custom_call.1} parent=5 // pred_check_branch
        %1029 = sbr.rel (%p1027) target = $region84
      $region83: #{tpu_custom_call.1} parent=5 // pred_region
        %s1030 = ssub.s32 %s23, 2
        // Predicated region
        $region85: #{tpu_custom_call.1} parent=83 // pred_check
          %p1031 = pneg %p351
        $region86: #{tpu_custom_call.1} parent=83 // pred_check_branch
          %1033 = sbr.rel (%p1031) target = $region88
        $region87: #{tpu_custom_call.1} parent=83 // pred_region
          %s1034 = sand.u32 %s336, 1
          %s1035 = scalar_lea.sflag [#allocation3], %s1034
          %s1036 = sand.u32 %s336, 1
          %s1037 = smul.addr %s1036, 8
          %s1038 = scalar_lea.vmem [#allocation2], %s1037
          %1040 = dma.done %s1035, 128
        $region88: #{tpu_custom_call.1} parent=83 // pred_fallthru
          _
      $region84: #{tpu_custom_call.1} parent=5 // pred_fallthru
        _
    $region6: #{tpu_custom_call.1} parent=1 // loop_footer
      %s27 = sadd.s32 1, %s23
    $region7: #{tpu_custom_call.1} parent=1 // loop_footer_branch
      %22 = sbr.rel target = $region3
    $region8: #{tpu_custom_call.1} parent=1 // loop_exit
      _
    %1041 = vsyncpa [#allocation3], 1
    %s1042 = scalar_lea.sflag [#allocation3], 1
    %1043 = vsyncpa %s1042, 1

</llo_original>
